<compile_context>
chip_gen: v7x
topology: tpu7x:2x2x1
jax: 0.10.0
libtpu: 0.0.40
codegen_flags: <defaults>
</compile_context>

<pallas_src>
import functools

import jax
import jax.numpy as jnp
from jax.experimental import pallas as pl
from jax.experimental.pallas import tpu as pltpu


def _round_up(x, m):
    return (x + m - 1) // m * m


def _pick_tile(mp):
    for t in (1024, 512, 256, 128):
        if mp % t == 0:
            return t
    return 128


# ----------------------------- Pallas kernels ------------------------------


def _matmul_epilogue_kernel(w_ref, x_ref, b_ref, o_ref, *, use_bias, relu,
                            sigmoid_from):
    """o = epilogue(w @ x): w (Cout, K) bf16, x (K, tm) bf16 -> (Cout, tm) f32."""
    acc = jnp.dot(w_ref[...], x_ref[...], preferred_element_type=jnp.float32)
    if use_bias:
        acc = acc + b_ref[...]                       # (Cout, 1) broadcast over lanes
    if sigmoid_from is not None:                     # fused sigmoid on mask rows (EUP)
        row = jax.lax.broadcasted_iota(jnp.int32, acc.shape, 0)
        acc = jnp.where(row >= sigmoid_from, 1.0 / (1.0 + jnp.exp(-acc)), acc)
    if relu:
        acc = jnp.maximum(acc, 0.0)
    o_ref[...] = acc.astype(o_ref.dtype)


def matmul_cm(w, x, bias=None, *, relu=False, sigmoid_from=None):
    """Channel-major grouped matmul with fused epilogue.

    w: (G, Cout, K), x: (G, B, K, M), bias: (G, Cout) or None.
    Returns (G, B, Cout, M) float32; the pixel axis M sits on lanes (lane-dense
    stores), channels sit on sublanes.
    """
    G, Cout, K = w.shape
    Gx, B, Kx, M = x.shape
    assert G == Gx and K == Kx, (w.shape, x.shape)
    Mp = _round_up(M, 128)
    if Mp != M:
        x = jnp.pad(x, ((0, 0), (0, 0), (0, 0), (0, Mp - M)))
    tm = _pick_tile(Mp)

    use_bias = bias is not None
    if bias is None:
        bias = jnp.zeros((G, Cout), jnp.float32)
    bias = bias.reshape(G, Cout, 1).astype(jnp.float32)
    w = w.astype(jnp.bfloat16)                       # bf16 MXU inputs, f32 accumulate
    x = x.astype(jnp.bfloat16)

    kernel = functools.partial(_matmul_epilogue_kernel, use_bias=use_bias,
                               relu=relu, sigmoid_from=sigmoid_from)
    out = pl.pallas_call(
        kernel,
        out_shape=jax.ShapeDtypeStruct((G, B, Cout, Mp), jnp.float32),
        grid=(G, B, Mp // tm),
        in_specs=[
            pl.BlockSpec((None, Cout, K), lambda g, b, m: (g, 0, 0)),
            pl.BlockSpec((None, None, K, tm), lambda g, b, m: (g, b, 0, m)),
            pl.BlockSpec((None, Cout, 1), lambda g, b, m: (g, 0, 0)),
        ],
        out_specs=pl.BlockSpec((None, None, Cout, tm),
                               lambda g, b, m: (g, b, 0, m)),
        compiler_params=pltpu.CompilerParams(
            dimension_semantics=("parallel", "parallel", "parallel")),
    )(w, x, bias)
    return out[..., :M]


def _affine_relu_kernel(x_ref, s_ref, t_ref, o_ref):
    o_ref[...] = jnp.maximum(x_ref[...] * s_ref[...] + t_ref[...],
                             0.0).astype(o_ref.dtype)


def bn_relu_apply(x, scale, shift):
    """relu(x * scale + shift) per channel; x: (B, C, M) f32, lane-dense tiles."""
    B, C, M = x.shape
    Mp = _round_up(M, 128)
    if Mp != M:
        x = jnp.pad(x, ((0, 0), (0, 0), (0, Mp - M)))
    tm = _pick_tile(Mp)
    out = pl.pallas_call(
        _affine_relu_kernel,
        out_shape=jax.ShapeDtypeStruct((B, C, Mp), jnp.float32),
        grid=(B, Mp // tm),
        in_specs=[
            pl.BlockSpec((None, C, tm), lambda b, m: (b, 0, m)),
            pl.BlockSpec((C, 1), lambda b, m: (0, 0)),
            pl.BlockSpec((C, 1), lambda b, m: (0, 0)),
        ],
        out_specs=pl.BlockSpec((None, C, tm), lambda b, m: (b, 0, m)),
        compiler_params=pltpu.CompilerParams(
            dimension_semantics=("parallel", "parallel")),
    )(x, scale.reshape(C, 1).astype(jnp.float32),
      shift.reshape(C, 1).astype(jnp.float32))
    return out[..., :M]


# ------------------------------- JAX glue -----------------------------------


def _im2col_cm(x, k, pad):
    """x: (N, C, H, W) -> (N, k*k*C, H*W); rows ordered (tap, channel)."""
    N, C, H, W = x.shape
    xp = jnp.pad(x, ((0, 0), (0, 0), (pad, pad), (pad, pad)))
    cols = [xp[:, :, i:i + H, j:j + W].reshape(N, C, H * W)
            for i in range(k) for j in range(k)]
    return jnp.concatenate(cols, axis=1)


def _conv_w_cm(w):
    """(Cout, Cin, kh, kw) -> (Cout, kh*kw*Cin); columns ordered (tap, cin)."""
    Cout, Cin, kh, kw = w.shape
    return jnp.transpose(w, (0, 2, 3, 1)).reshape(Cout, kh * kw * Cin)


def _deform_sample_cm(x, dy, dx, mask):
    """DCNv2 modulated bilinear sampling, channel-major.
    x: (N, C, H, W); dy, dx, mask: (N, 9, H*W).  Zero outside the image.
    Returns sampled patches (N, 9*C, H*W), rows ordered (tap, channel)."""
    # TODO(synk): data-dependent bilinear gather stays in XLA; moving it in-VMEM
    # needs Mosaic dynamic-gather (or a manual DMA gather) we do not rely on here.
    N, C, H, W = x.shape
    M = H * W
    x_flat = x.reshape(N, C, M)
    ii = (jnp.arange(M, dtype=jnp.int32) // W).astype(jnp.float32)
    jj = (jnp.arange(M, dtype=jnp.int32) % W).astype(jnp.float32)
    ky = jnp.repeat(jnp.arange(3, dtype=jnp.float32) - 1.0, 3)   # tap k = ky*3+kx
    kx = jnp.tile(jnp.arange(3, dtype=jnp.float32) - 1.0, 3)
    py = ii[None, None, :] + ky[None, :, None] + dy              # (N, 9, M)
    px = jj[None, None, :] + kx[None, :, None] + dx
    y0 = jnp.floor(py)
    x0 = jnp.floor(px)
    ly = py - y0
    lx = px - x0

    def corner(yc, xc):
        valid = (yc >= 0) & (yc <= H - 1) & (xc >= 0) & (xc <= W - 1)
        yi = jnp.clip(yc, 0, H - 1).astype(jnp.int32)
        xi = jnp.clip(xc, 0, W - 1).astype(jnp.int32)
        idx = (yi * W + xi).reshape(N, 1, 9 * M)
        idx = jnp.broadcast_to(idx, (N, C, 9 * M))
        vals = jnp.take_along_axis(x_flat, idx, axis=2).reshape(N, C, 9, M)
        return vals * valid[:, None, :, :].astype(x.dtype)

    v00 = corner(y0, x0)
    v01 = corner(y0, x0 + 1.0)
    v10 = corner(y0 + 1.0, x0)
    v11 = corner(y0 + 1.0, x0 + 1.0)
    w00 = ((1.0 - ly) * (1.0 - lx))[:, None]
    w01 = ((1.0 - ly) * lx)[:, None]
    w10 = (ly * (1.0 - lx))[:, None]
    w11 = (ly * lx)[:, None]
    sampled = w00 * v00 + w01 * v01 + w10 * v10 + w11 * v11      # (N, C, 9, M)
    sampled = sampled * mask[:, None, :, :]
    return jnp.transpose(sampled, (0, 2, 1, 3)).reshape(N, 9 * C, M)


def _phase_weights(wt):
    """ConvTranspose2d weight (Cin, Cout, 4, 4) -> (4, Cout, 4*Cin):
    one 2x2 forward-conv weight matrix per output sub-pixel phase
    (phase index = py*2+px; columns ordered (dy*2+dx, cin))."""
    phases = []
    for py in (0, 1):
        for px in (0, 1):
            taps = [wt[:, :, 3 - py - 2 * dy, 3 - px - 2 * dx].T   # (Cout, Cin)
                    for dy in (0, 1) for dx in (0, 1)]
            phases.append(jnp.concatenate(taps, axis=1))
    return jnp.stack(phases, axis=0)


def _phase_patches(feat):
    """feat (N, C, H, W) -> (4, N, 4*C, H*W): the 2x2 patches feeding each
    output sub-pixel phase of the stride-2 transposed conv."""
    N, C, H, W = feat.shape
    phases = []
    for py in (0, 1):
        for px in (0, 1):
            fp = jnp.pad(feat, ((0, 0), (0, 0), (1 - py, py), (1 - px, px)))
            cols = [fp[:, :, dy:dy + H, dx:dx + W].reshape(N, C, H * W)
                    for dy in (0, 1) for dx in (0, 1)]
            phases.append(jnp.concatenate(cols, axis=1))
    return jnp.stack(phases, axis=0)


def _bn_scale_shift(x, gamma, beta, axes, eps):
    """Train-mode (biased) batch stats -> per-channel scale/shift."""
    mean = jnp.mean(x, axis=axes)
    var = jnp.var(x, axis=axes)
    scale = gamma * jax.lax.rsqrt(var + eps)
    return scale, beta - mean * scale


def upsample_layer_forward(x_nchw, params, *, eps=1e-5):
    x = x_nchw.astype(jnp.float32)
    N, inC, H, W = x.shape
    outC = params["dcn_w"].shape[0]
    M = H * W

    # --- DCN offset/mask conv: 3x3 s1 p1 (Pallas matmul, fused bias+sigmoid) ---
    patches = _im2col_cm(x, 3, 1)                        # (N, 9*inC, M)
    w_off = _conv_w_cm(params["offset_w"])               # (27, 9*inC)
    # DCNv2 layout: conv-output channels (2k, 2k+1) are (dy, dx) of kernel point
    # k; channels 18:27 are the modulation mask.  Permute the output channels so
    # the kernel emits rows [dy(0:9) | dx(9:18) | mask(18:27)] and can apply the
    # sigmoid to a contiguous row range inside its epilogue.
    perm = jnp.array([2 * k for k in range(9)] +
                     [2 * k + 1 for k in range(9)] + list(range(18, 27)))
    off = matmul_cm(w_off[perm][None], patches[None],
                    params["offset_b"][perm][None], sigmoid_from=18)[0]
    dy, dx, mask = off[:, 0:9], off[:, 9:18], off[:, 18:27]      # (N, 9, M)

    # --- deformable modulated bilinear sampling (XLA gather, see TODO) ---
    sampled = _deform_sample_cm(x, dy, dx, mask)         # (N, 9*inC, M)

    # --- DCN main 3x3 conv (Pallas matmul + fused bias) ---
    w_dcn = _conv_w_cm(params["dcn_w"])                  # (outC, 9*inC)
    dcn = matmul_cm(w_dcn[None], sampled[None], params["dcn_b"][None])[0]

    # --- BN1 (batch stats) + ReLU: stats are a tiny XLA reduction, the apply is
    #     a tiled, fully-parallel Pallas pass ---
    s1, t1 = _bn_scale_shift(dcn, params["bn1_gamma"], params["bn1_beta"],
                             (0, 2), eps)
    feat = bn_relu_apply(dcn, s1, t1).reshape(N, outC, H, W)

    # --- ConvTranspose2d(k=4, s=2, p=1, bias=False) as four 2x2 phase convs ---
    pw = _phase_weights(params["convt_w"])               # (4, outC, 4*outC)
    pp = _phase_patches(feat)                            # (4, N, 4*outC, M)
    ct = matmul_cm(pw, pp)                               # (4, N, outC, M)

    # --- BN2 + ReLU ---
    s2, t2 = _bn_scale_shift(ct, params["bn2_gamma"], params["bn2_beta"],
                             (0, 1, 3), eps)
    ct = bn_relu_apply(ct.reshape(4 * N, outC, M), s2, t2)
    ct = ct.reshape(2, 2, N, outC, H, W)                 # (py, px, N, C, H, W)

    # interleave phases: out[n, c, 2i+py, 2j+px] = ct[py, px, n, c, i, j]
    out = jnp.transpose(ct, (2, 3, 4, 0, 5, 1)).reshape(N, outC, 2 * H, 2 * W)
    return out


# --------------------------------- main --------------------------------------

if __name__ == "__main__":
    key = jax.random.PRNGKey(0)
    N, inC, outC, H, W = 2, 4, 8, 16, 16
    ks = jax.random.split(key, 9)
    x = jax.random.normal(ks[0], (N, inC, H, W), jnp.float32)
    params = {
        # NOTE: the reference DCN zero-initializes the offset/mask conv; small
        # random values are used so the bilinear-sampling path is exercised.
        "offset_w": 0.05 * jax.random.normal(ks[1], (27, inC, 3, 3), jnp.float32),
        "offset_b": 0.05 * jax.random.normal(ks[2], (27,), jnp.float32),
        "dcn_w": 0.1 * jax.random.normal(ks[3], (outC, inC, 3, 3), jnp.float32),
        "dcn_b": 0.1 * jax.random.normal(ks[4], (outC,), jnp.float32),
        "bn1_gamma": 1.0 + 0.1 * jax.random.normal(ks[5], (outC,), jnp.float32),
        "bn1_beta": 0.1 * jax.random.normal(ks[6], (outC,), jnp.float32),
        # ConvTranspose2d weight layout: (in_channels, out_channels, kH, kW)
        "convt_w": 0.1 * jax.random.normal(ks[7], (outC, outC, 4, 4), jnp.float32),
        "bn2_gamma": 1.0 + 0.05 * jax.random.normal(ks[8], (outC,), jnp.float32),
        "bn2_beta": jnp.zeros((outC,), jnp.float32),
    }

    out = jax.jit(upsample_layer_forward)(x, params)
    out = jax.block_until_ready(out)
    assert out.shape == (N, outC, 2 * H, 2 * W), out.shape
    assert bool(jnp.all(jnp.isfinite(out)))
    print("KERNEL_OK")
</pallas_src>

<mosaic_0001>
module attributes {stable_mosaic.version = 11 : i64} {
  func.func @_matmul_epilogue_kernel(%arg0: i32, %arg1: i32, %arg2: i32, %arg3: memref<1x27x36xbf16, #tpu.memory_space<vmem>>, %arg4: memref<1x1x36x256xbf16, #tpu.memory_space<vmem>>, %arg5: memref<1x27x1xf32, #tpu.memory_space<vmem>>, %arg6: memref<1x1x27x256xf32, #tpu.memory_space<vmem>>) attributes {dimension_semantics = [#tpu.dimension_semantics<parallel>, #tpu.dimension_semantics<parallel>, #tpu.dimension_semantics<parallel>], iteration_bounds = array<i64: 1, 2, 1>, scalar_prefetch = 0 : i64, scratch_operands = 0 : i64, tpu.core_type = #tpu.core_type<tc>, window_params = [{transform_indices = @transform_0, window_bounds = array<i64: 1, 27, 36>}, {transform_indices = @transform_1, window_bounds = array<i64: 1, 1, 36, 256>}, {transform_indices = @transform_2, window_bounds = array<i64: 1, 27, 1>}, {transform_indices = @transform_3, window_bounds = array<i64: 1, 1, 27, 256>}]} {
    %c0 = arith.constant 0 : index
    %c0_0 = arith.constant 0 : index
    %c0_1 = arith.constant 0 : index
    %0 = vector.load %arg3[%c0, %c0_0, %c0_1] : memref<1x27x36xbf16, #tpu.memory_space<vmem>>, vector<1x27x36xbf16>
    %1 = vector.shape_cast %0 : vector<1x27x36xbf16> to vector<27x36xbf16>
    %c0_2 = arith.constant 0 : index
    %c0_3 = arith.constant 0 : index
    %c0_4 = arith.constant 0 : index
    %c0_5 = arith.constant 0 : index
    %2 = vector.load %arg4[%c0_2, %c0_3, %c0_4, %c0_5] : memref<1x1x36x256xbf16, #tpu.memory_space<vmem>>, vector<1x1x36x256xbf16>
    %3 = vector.shape_cast %2 : vector<1x1x36x256xbf16> to vector<36x256xbf16>
    %cst = arith.constant dense<0.000000e+00> : vector<27x256xf32>
    %4 = tpu.matmul %1, %3, %cst {dimension_numbers = #tpu.dot_dimension_numbers<[1], [0], [0], [1], [0, 0, 1, 1], [], []>} : vector<27x36xbf16>, vector<36x256xbf16>, vector<27x256xf32> -> vector<27x256xf32>
    %c0_6 = arith.constant 0 : index
    %c0_7 = arith.constant 0 : index
    %c0_8 = arith.constant 0 : index
    %5 = vector.load %arg5[%c0_6, %c0_7, %c0_8] : memref<1x27x1xf32, #tpu.memory_space<vmem>>, vector<1x27x1xf32>
    %6 = vector.shape_cast %5 : vector<1x27x1xf32> to vector<27x1xf32>
    %7 = vector.broadcast %6 : vector<27x1xf32> to vector<27x256xf32>
    %8 = arith.addf %4, %7 : vector<27x256xf32>
    %9 = tpu.iota {dimensions = array<i32: 0>} : vector<27x256xi32>
    %c18_i32 = arith.constant 18 : i32
    %10 = vector.broadcast %c18_i32 : i32 to vector<27x256xi32>
    %11 = arith.cmpi sge, %9, %10 : vector<27x256xi32>
    %cst_9 = arith.constant 0.000000e+00 : f32
    %12 = vector.broadcast %cst_9 : f32 to vector<27x256xf32>
    %13 = arith.subf %12, %8 : vector<27x256xf32>
    %14 = math.exp %13 : vector<27x256xf32>
    %cst_10 = arith.constant 1.000000e+00 : f32
    %15 = vector.broadcast %cst_10 : f32 to vector<27x256xf32>
    %16 = arith.addf %15, %14 : vector<27x256xf32>
    %cst_11 = arith.constant 1.000000e+00 : f32
    %17 = vector.broadcast %cst_11 : f32 to vector<27x256xf32>
    %18 = arith.divf %17, %16 : vector<27x256xf32>
    %19 = arith.select %11, %18, %8 : vector<27x256xi1>, vector<27x256xf32>
    %c0_12 = arith.constant 0 : index
    %c0_13 = arith.constant 0 : index
    %c0_14 = arith.constant 0 : index
    %c0_15 = arith.constant 0 : index
    %20 = vector.load %arg6[%c0_12, %c0_13, %c0_14, %c0_15] : memref<1x1x27x256xf32, #tpu.memory_space<vmem>>, vector<1x1x27x256xf32>
    %21 = vector.shape_cast %20 : vector<1x1x27x256xf32> to vector<27x256xf32>
    %22 = vector.shape_cast %19 : vector<27x256xf32> to vector<1x1x27x256xf32>
    tpu.vector_store %arg6[%c0_12, %c0_13, %c0_14, %c0_15], %22 {strides = array<i32>} : memref<1x1x27x256xf32, #tpu.memory_space<vmem>>, vector<1x1x27x256xf32>,
    return
  }
  func.func @transform_0(%arg0: i32, %arg1: i32, %arg2: i32) -> (i32, i32, i32) {
    %c0_i32 = arith.constant 0 : i32
    %c0_i32_0 = arith.constant 0 : i32
    %c0_i32_1 = arith.constant 0 : i32
    return %arg0, %c0_i32, %c0_i32_0 : i32, i32, i32
  }
  func.func @transform_1(%arg0: i32, %arg1: i32, %arg2: i32) -> (i32, i32, i32, i32) {
    %c0_i32 = arith.constant 0 : i32
    %c0_i32_0 = arith.constant 0 : i32
    return %arg0, %arg1, %c0_i32, %arg2 : i32, i32, i32, i32
  }
  func.func @transform_2(%arg0: i32, %arg1: i32, %arg2: i32) -> (i32, i32, i32) {
    %c0_i32 = arith.constant 0 : i32
    %c0_i32_0 = arith.constant 0 : i32
    %c0_i32_1 = arith.constant 0 : i32
    return %arg0, %c0_i32, %c0_i32_0 : i32, i32, i32
  }
  func.func @transform_3(%arg0: i32, %arg1: i32, %arg2: i32) -> (i32, i32, i32, i32) {
    %c0_i32 = arith.constant 0 : i32
    %c0_i32_0 = arith.constant 0 : i32
    return %arg0, %arg1, %c0_i32, %arg2 : i32, i32, i32, i32
  }
}

module attributes {stable_mosaic.version = 11 : i64} {
  func.func @_matmul_epilogue_kernel(%arg0: i32, %arg1: i32, %arg2: i32, %arg3: memref<1x8x36xbf16, #tpu.memory_space<vmem>>, %arg4: memref<1x1x36x256xbf16, #tpu.memory_space<vmem>>, %arg5: memref<1x8x1xf32, #tpu.memory_space<vmem>>, %arg6: memref<1x1x8x256xf32, #tpu.memory_space<vmem>>) attributes {dimension_semantics = [#tpu.dimension_semantics<parallel>, #tpu.dimension_semantics<parallel>, #tpu.dimension_semantics<parallel>], iteration_bounds = array<i64: 1, 2, 1>, scalar_prefetch = 0 : i64, scratch_operands = 0 : i64, tpu.core_type = #tpu.core_type<tc>, window_params = [{transform_indices = @transform_0, window_bounds = array<i64: 1, 8, 36>}, {transform_indices = @transform_1, window_bounds = array<i64: 1, 1, 36, 256>}, {transform_indices = @transform_2, window_bounds = array<i64: 1, 8, 1>}, {transform_indices = @transform_3, window_bounds = array<i64: 1, 1, 8, 256>}]} {
    %c0 = arith.constant 0 : index
    %c0_0 = arith.constant 0 : index
    %c0_1 = arith.constant 0 : index
    %0 = vector.load %arg3[%c0, %c0_0, %c0_1] : memref<1x8x36xbf16, #tpu.memory_space<vmem>>, vector<1x8x36xbf16>
    %1 = vector.shape_cast %0 : vector<1x8x36xbf16> to vector<8x36xbf16>
    %c0_2 = arith.constant 0 : index
    %c0_3 = arith.constant 0 : index
    %c0_4 = arith.constant 0 : index
    %c0_5 = arith.constant 0 : index
    %2 = vector.load %arg4[%c0_2, %c0_3, %c0_4, %c0_5] : memref<1x1x36x256xbf16, #tpu.memory_space<vmem>>, vector<1x1x36x256xbf16>
    %3 = vector.shape_cast %2 : vector<1x1x36x256xbf16> to vector<36x256xbf16>
    %cst = arith.constant dense<0.000000e+00> : vector<8x256xf32>
    %4 = tpu.matmul %1, %3, %cst {dimension_numbers = #tpu.dot_dimension_numbers<[1], [0], [0], [1], [0, 0, 1, 1], [], []>} : vector<8x36xbf16>, vector<36x256xbf16>, vector<8x256xf32> -> vector<8x256xf32>
    %c0_6 = arith.constant 0 : index
    %c0_7 = arith.constant 0 : index
    %c0_8 = arith.constant 0 : index
    %5 = vector.load %arg5[%c0_6, %c0_7, %c0_8] : memref<1x8x1xf32, #tpu.memory_space<vmem>>, vector<1x8x1xf32>
    %6 = vector.shape_cast %5 : vector<1x8x1xf32> to vector<8x1xf32>
    %7 = vector.broadcast %6 : vector<8x1xf32> to vector<8x256xf32>
    %8 = arith.addf %4, %7 : vector<8x256xf32>
    %c0_9 = arith.constant 0 : index
    %c0_10 = arith.constant 0 : index
    %c0_11 = arith.constant 0 : index
    %c0_12 = arith.constant 0 : index
    %9 = vector.load %arg6[%c0_9, %c0_10, %c0_11, %c0_12] : memref<1x1x8x256xf32, #tpu.memory_space<vmem>>, vector<1x1x8x256xf32>
    %10 = vector.shape_cast %9 : vector<1x1x8x256xf32> to vector<8x256xf32>
    %11 = vector.shape_cast %8 : vector<8x256xf32> to vector<1x1x8x256xf32>
    tpu.vector_store %arg6[%c0_9, %c0_10, %c0_11, %c0_12], %11 {strides = array<i32>} : memref<1x1x8x256xf32, #tpu.memory_space<vmem>>, vector<1x1x8x256xf32>,
    return
  }
  func.func @transform_0(%arg0: i32, %arg1: i32, %arg2: i32) -> (i32, i32, i32) {
    %c0_i32 = arith.constant 0 : i32
    %c0_i32_0 = arith.constant 0 : i32
    %c0_i32_1 = arith.constant 0 : i32
    return %arg0, %c0_i32, %c0_i32_0 : i32, i32, i32
  }
  func.func @transform_1(%arg0: i32, %arg1: i32, %arg2: i32) -> (i32, i32, i32, i32) {
    %c0_i32 = arith.constant 0 : i32
    %c0_i32_0 = arith.constant 0 : i32
    return %arg0, %arg1, %c0_i32, %arg2 : i32, i32, i32, i32
  }
  func.func @transform_2(%arg0: i32, %arg1: i32, %arg2: i32) -> (i32, i32, i32) {
    %c0_i32 = arith.constant 0 : i32
    %c0_i32_0 = arith.constant 0 : i32
    %c0_i32_1 = arith.constant 0 : i32
    return %arg0, %c0_i32, %c0_i32_0 : i32, i32, i32
  }
  func.func @transform_3(%arg0: i32, %arg1: i32, %arg2: i32) -> (i32, i32, i32, i32) {
    %c0_i32 = arith.constant 0 : i32
    %c0_i32_0 = arith.constant 0 : i32
    return %arg0, %arg1, %c0_i32, %arg2 : i32, i32, i32, i32
  }
}

module attributes {stable_mosaic.version = 11 : i64} {
  func.func @_affine_relu_kernel(%arg0: i32, %arg1: i32, %arg2: memref<1x8x256xf32, #tpu.memory_space<vmem>>, %arg3: memref<8x1xf32, #tpu.memory_space<vmem>>, %arg4: memref<8x1xf32, #tpu.memory_space<vmem>>, %arg5: memref<1x8x256xf32, #tpu.memory_space<vmem>>) attributes {dimension_semantics = [#tpu.dimension_semantics<parallel>, #tpu.dimension_semantics<parallel>], iteration_bounds = array<i64: 2, 1>, scalar_prefetch = 0 : i64, scratch_operands = 0 : i64, tpu.core_type = #tpu.core_type<tc>, window_params = [{transform_indices = @transform_0, window_bounds = array<i64: 1, 8, 256>}, {pipeline_mode = #tpu.pipeline_mode<synchronous>, transform_indices = @transform_1, window_bounds = array<i64: 8, 1>}, {pipeline_mode = #tpu.pipeline_mode<synchronous>, transform_indices = @transform_2, window_bounds = array<i64: 8, 1>}, {transform_indices = @transform_3, window_bounds = array<i64: 1, 8, 256>}]} {
    %c0 = arith.constant 0 : index
    %c0_0 = arith.constant 0 : index
    %c0_1 = arith.constant 0 : index
    %0 = vector.load %arg2[%c0, %c0_0, %c0_1] : memref<1x8x256xf32, #tpu.memory_space<vmem>>, vector<1x8x256xf32>
    %1 = vector.shape_cast %0 : vector<1x8x256xf32> to vector<8x256xf32>
    %c0_2 = arith.constant 0 : index
    %c0_3 = arith.constant 0 : index
    %2 = vector.load %arg3[%c0_2, %c0_3] : memref<8x1xf32, #tpu.memory_space<vmem>>, vector<8x1xf32>
    %3 = vector.broadcast %2 : vector<8x1xf32> to vector<8x256xf32>
    %4 = arith.mulf %1, %3 : vector<8x256xf32>
    %c0_4 = arith.constant 0 : index
    %c0_5 = arith.constant 0 : index
    %5 = vector.load %arg4[%c0_4, %c0_5] : memref<8x1xf32, #tpu.memory_space<vmem>>, vector<8x1xf32>
    %6 = vector.broadcast %5 : vector<8x1xf32> to vector<8x256xf32>
    %7 = arith.addf %4, %6 : vector<8x256xf32>
    %cst = arith.constant 0.000000e+00 : f32
    %8 = vector.broadcast %cst : f32 to vector<8x256xf32>
    %9 = arith.maximumf %7, %8 : vector<8x256xf32>
    %c0_6 = arith.constant 0 : index
    %c0_7 = arith.constant 0 : index
    %c0_8 = arith.constant 0 : index
    %10 = vector.load %arg5[%c0_6, %c0_7, %c0_8] : memref<1x8x256xf32, #tpu.memory_space<vmem>>, vector<1x8x256xf32>
    %11 = vector.shape_cast %10 : vector<1x8x256xf32> to vector<8x256xf32>
    %12 = vector.shape_cast %9 : vector<8x256xf32> to vector<1x8x256xf32>
    tpu.vector_store %arg5[%c0_6, %c0_7, %c0_8], %12 {strides = array<i32>} : memref<1x8x256xf32, #tpu.memory_space<vmem>>, vector<1x8x256xf32>,
    return
  }
  func.func @transform_0(%arg0: i32, %arg1: i32) -> (i32, i32, i32) {
    %c0_i32 = arith.constant 0 : i32
    %c0_i32_0 = arith.constant 0 : i32
    return %arg0, %c0_i32, %arg1 : i32, i32, i32
  }
  func.func @transform_1(%arg0: i32, %arg1: i32) -> (i32, i32) {
    %c0_i32 = arith.constant 0 : i32
    %c0_i32_0 = arith.constant 0 : i32
    %c0_i32_1 = arith.constant 0 : i32
    return %c0_i32, %c0_i32_0 : i32, i32
  }
  func.func @transform_2(%arg0: i32, %arg1: i32) -> (i32, i32) {
    %c0_i32 = arith.constant 0 : i32
    %c0_i32_0 = arith.constant 0 : i32
    %c0_i32_1 = arith.constant 0 : i32
    return %c0_i32, %c0_i32_0 : i32, i32
  }
  func.func @transform_3(%arg0: i32, %arg1: i32) -> (i32, i32, i32) {
    %c0_i32 = arith.constant 0 : i32
    %c0_i32_0 = arith.constant 0 : i32
    return %arg0, %c0_i32, %arg1 : i32, i32, i32
  }
}

module attributes {stable_mosaic.version = 11 : i64} {
  func.func @_matmul_epilogue_kernel(%arg0: i32, %arg1: i32, %arg2: i32, %arg3: memref<1x8x32xbf16, #tpu.memory_space<vmem>>, %arg4: memref<1x1x32x256xbf16, #tpu.memory_space<vmem>>, %arg5: memref<1x8x1xf32, #tpu.memory_space<vmem>>, %arg6: memref<1x1x8x256xf32, #tpu.memory_space<vmem>>) attributes {dimension_semantics = [#tpu.dimension_semantics<parallel>, #tpu.dimension_semantics<parallel>, #tpu.dimension_semantics<parallel>], iteration_bounds = array<i64: 4, 2, 1>, scalar_prefetch = 0 : i64, scratch_operands = 0 : i64, tpu.core_type = #tpu.core_type<tc>, window_params = [{transform_indices = @transform_0, window_bounds = array<i64: 1, 8, 32>}, {transform_indices = @transform_1, window_bounds = array<i64: 1, 1, 32, 256>}, {transform_indices = @transform_2, window_bounds = array<i64: 1, 8, 1>}, {transform_indices = @transform_3, window_bounds = array<i64: 1, 1, 8, 256>}]} {
    %c0 = arith.constant 0 : index
    %c0_0 = arith.constant 0 : index
    %c0_1 = arith.constant 0 : index
    %0 = vector.load %arg3[%c0, %c0_0, %c0_1] : memref<1x8x32xbf16, #tpu.memory_space<vmem>>, vector<1x8x32xbf16>
    %1 = vector.shape_cast %0 : vector<1x8x32xbf16> to vector<8x32xbf16>
    %c0_2 = arith.constant 0 : index
    %c0_3 = arith.constant 0 : index
    %c0_4 = arith.constant 0 : index
    %c0_5 = arith.constant 0 : index
    %2 = vector.load %arg4[%c0_2, %c0_3, %c0_4, %c0_5] : memref<1x1x32x256xbf16, #tpu.memory_space<vmem>>, vector<1x1x32x256xbf16>
    %3 = vector.shape_cast %2 : vector<1x1x32x256xbf16> to vector<32x256xbf16>
    %cst = arith.constant dense<0.000000e+00> : vector<8x256xf32>
    %4 = tpu.matmul %1, %3, %cst {dimension_numbers = #tpu.dot_dimension_numbers<[1], [0], [0], [1], [0, 0, 1, 1], [], []>} : vector<8x32xbf16>, vector<32x256xbf16>, vector<8x256xf32> -> vector<8x256xf32>
    %c0_6 = arith.constant 0 : index
    %c0_7 = arith.constant 0 : index
    %c0_8 = arith.constant 0 : index
    %c0_9 = arith.constant 0 : index
    %5 = vector.load %arg6[%c0_6, %c0_7, %c0_8, %c0_9] : memref<1x1x8x256xf32, #tpu.memory_space<vmem>>, vector<1x1x8x256xf32>
    %6 = vector.shape_cast %5 : vector<1x1x8x256xf32> to vector<8x256xf32>
    %7 = vector.shape_cast %4 : vector<8x256xf32> to vector<1x1x8x256xf32>
    tpu.vector_store %arg6[%c0_6, %c0_7, %c0_8, %c0_9], %7 {strides = array<i32>} : memref<1x1x8x256xf32, #tpu.memory_space<vmem>>, vector<1x1x8x256xf32>,
    return
  }
  func.func @transform_0(%arg0: i32, %arg1: i32, %arg2: i32) -> (i32, i32, i32) {
    %c0_i32 = arith.constant 0 : i32
    %c0_i32_0 = arith.constant 0 : i32
    %c0_i32_1 = arith.constant 0 : i32
    return %arg0, %c0_i32, %c0_i32_0 : i32, i32, i32
  }
  func.func @transform_1(%arg0: i32, %arg1: i32, %arg2: i32) -> (i32, i32, i32, i32) {
    %c0_i32 = arith.constant 0 : i32
    %c0_i32_0 = arith.constant 0 : i32
    return %arg0, %arg1, %c0_i32, %arg2 : i32, i32, i32, i32
  }
  func.func @transform_2(%arg0: i32, %arg1: i32, %arg2: i32) -> (i32, i32, i32) {
    %c0_i32 = arith.constant 0 : i32
    %c0_i32_0 = arith.constant 0 : i32
    %c0_i32_1 = arith.constant 0 : i32
    return %arg0, %c0_i32, %c0_i32_0 : i32, i32, i32
  }
  func.func @transform_3(%arg0: i32, %arg1: i32, %arg2: i32) -> (i32, i32, i32, i32) {
    %c0_i32 = arith.constant 0 : i32
    %c0_i32_0 = arith.constant 0 : i32
    return %arg0, %arg1, %c0_i32, %arg2 : i32, i32, i32, i32
  }
}

module attributes {stable_mosaic.version = 11 : i64} {
  func.func @_affine_relu_kernel(%arg0: i32, %arg1: i32, %arg2: memref<1x8x256xf32, #tpu.memory_space<vmem>>, %arg3: memref<8x1xf32, #tpu.memory_space<vmem>>, %arg4: memref<8x1xf32, #tpu.memory_space<vmem>>, %arg5: memref<1x8x256xf32, #tpu.memory_space<vmem>>) attributes {dimension_semantics = [#tpu.dimension_semantics<parallel>, #tpu.dimension_semantics<parallel>], iteration_bounds = array<i64: 8, 1>, scalar_prefetch = 0 : i64, scratch_operands = 0 : i64, tpu.core_type = #tpu.core_type<tc>, window_params = [{transform_indices = @transform_0, window_bounds = array<i64: 1, 8, 256>}, {pipeline_mode = #tpu.pipeline_mode<synchronous>, transform_indices = @transform_1, window_bounds = array<i64: 8, 1>}, {pipeline_mode = #tpu.pipeline_mode<synchronous>, transform_indices = @transform_2, window_bounds = array<i64: 8, 1>}, {transform_indices = @transform_3, window_bounds = array<i64: 1, 8, 256>}]} {
    %c0 = arith.constant 0 : index
    %c0_0 = arith.constant 0 : index
    %c0_1 = arith.constant 0 : index
    %0 = vector.load %arg2[%c0, %c0_0, %c0_1] : memref<1x8x256xf32, #tpu.memory_space<vmem>>, vector<1x8x256xf32>
    %1 = vector.shape_cast %0 : vector<1x8x256xf32> to vector<8x256xf32>
    %c0_2 = arith.constant 0 : index
    %c0_3 = arith.constant 0 : index
    %2 = vector.load %arg3[%c0_2, %c0_3] : memref<8x1xf32, #tpu.memory_space<vmem>>, vector<8x1xf32>
    %3 = vector.broadcast %2 : vector<8x1xf32> to vector<8x256xf32>
    %4 = arith.mulf %1, %3 : vector<8x256xf32>
    %c0_4 = arith.constant 0 : index
    %c0_5 = arith.constant 0 : index
    %5 = vector.load %arg4[%c0_4, %c0_5] : memref<8x1xf32, #tpu.memory_space<vmem>>, vector<8x1xf32>
    %6 = vector.broadcast %5 : vector<8x1xf32> to vector<8x256xf32>
    %7 = arith.addf %4, %6 : vector<8x256xf32>
    %cst = arith.constant 0.000000e+00 : f32
    %8 = vector.broadcast %cst : f32 to vector<8x256xf32>
    %9 = arith.maximumf %7, %8 : vector<8x256xf32>
    %c0_6 = arith.constant 0 : index
    %c0_7 = arith.constant 0 : index
    %c0_8 = arith.constant 0 : index
    %10 = vector.load %arg5[%c0_6, %c0_7, %c0_8] : memref<1x8x256xf32, #tpu.memory_space<vmem>>, vector<1x8x256xf32>
    %11 = vector.shape_cast %10 : vector<1x8x256xf32> to vector<8x256xf32>
    %12 = vector.shape_cast %9 : vector<8x256xf32> to vector<1x8x256xf32>
    tpu.vector_store %arg5[%c0_6, %c0_7, %c0_8], %12 {strides = array<i32>} : memref<1x8x256xf32, #tpu.memory_space<vmem>>, vector<1x8x256xf32>,
    return
  }
  func.func @transform_0(%arg0: i32, %arg1: i32) -> (i32, i32, i32) {
    %c0_i32 = arith.constant 0 : i32
    %c0_i32_0 = arith.constant 0 : i32
    return %arg0, %c0_i32, %arg1 : i32, i32, i32
  }
  func.func @transform_1(%arg0: i32, %arg1: i32) -> (i32, i32) {
    %c0_i32 = arith.constant 0 : i32
    %c0_i32_0 = arith.constant 0 : i32
    %c0_i32_1 = arith.constant 0 : i32
    return %c0_i32, %c0_i32_0 : i32, i32
  }
  func.func @transform_2(%arg0: i32, %arg1: i32) -> (i32, i32) {
    %c0_i32 = arith.constant 0 : i32
    %c0_i32_0 = arith.constant 0 : i32
    %c0_i32_1 = arith.constant 0 : i32
    return %c0_i32, %c0_i32_0 : i32, i32
  }
  func.func @transform_3(%arg0: i32, %arg1: i32) -> (i32, i32, i32) {
    %c0_i32 = arith.constant 0 : i32
    %c0_i32_0 = arith.constant 0 : i32
    return %arg0, %c0_i32, %arg1 : i32, i32, i32
  }
}

</mosaic_0001>

<llo_original>
// kernel: tile.8
$region0: #{tile.8}
  #allocation0 [shape = 's32[1]{0}', space=sflag, size = 0x4, scoped, tag = 'scoped memory for tile.8']
  %s0 = inlined_call_operand.vmem [shape: f32[3], index: 0, kind: input, shape index: {}]
  %s1 = inlined_call_operand.vmem [shape: f32[3,3], index: 1, kind: output, shape index: {}]
  // Predicated region
  $region2: #{tile.8} parent=0 // pred_check
    _
  $region3: #{tile.8} parent=0 // pred_check_branch
    %3 = sbr.rel (0) target = $region5
  $region4: #{tile.8} parent=0 // pred_region
    _
  $region5: #{tile.8} parent=0 // pred_fallthru
    _
  %v4 = vld [vmem:[%s0] ss:$0 sm:$0xff]
  %5 = vst [vmem:[%s1] sm:$0xf] %v4

// kernel: upsample_layer_forward.5
$region0: #{upsample_layer_forward.5}
  #allocation0 [shape = 'u32[]', space=smem, size = 0x4, offset = 0x4, fixed_abs, tag = 'smem constant byte address 0x4 - core index']
  #allocation1 [shape = 'u32[144,128]{1,0:T(1,128)}', space=vmem, size = 0x12000, scoped, tag = 'internal scratch']
  %s0 = inlined_call_operand.vmem [shape: bf16[1,27,36], index: 0, kind: input, shape index: {}]
  %s1 = inlined_call_operand.vmem [shape: bf16[1,2,36,256], index: 1, kind: input, shape index: {}]
  %s2 = inlined_call_operand.vmem [shape: f32[1,27,1], index: 2, kind: input, shape index: {}]
  %s3 = inlined_call_operand.vmem [shape: f32[1,2,27,256], index: 3, kind: output, shape index: {}]
  %s4 = sld [smem:[#allocation0]]
  $region45: #{upsample_layer_forward.5} parent=0
    _
  %s6 = ssub.s32 1, %s4
  %s7 = scalar_select 0, %s6, %s4
  loop: start=0, step=1, limit=4
  $region2: #{upsample_layer_forward.5} parent=0 // loop_pre_header
    _
  $region3: #{upsample_layer_forward.5} parent=0 // loop_header
    %s9 = sphi 0, %s13
    %p10 = scmp.ge.s32.totalorder %s9, 4
    %s16 = sphi 0, %s35
    %s17 = sphi 0, %s31
    %s18 = sphi 0, %s27
    %s19 = sphi 0, %s16
    %s20 = sphi 0, %s17
    %s21 = sphi 0, %s18
    %s22 = sphi 0, %s19
    %s23 = sphi 0, %s20
    %s24 = sphi 0, %s21
    %s38 = sphi 0, %s40
    %s41 = sphi 0, %s38
    %s42 = sphi 0, %s41
    %s58 = sphi 0, %s42
    %s68 = sphi 0, %s70
    %s71 = sphi 0, %s68
    %s72 = sphi 0, %s71
    %s88 = sphi 0, %s72
    %s94 = sphi 0, %s96
    %s97 = sphi 0, %s94
    %s98 = sphi 0, %s97
    %s114 = sphi 0, %s98
    %s124 = sphi 0, %s126
    %s127 = sphi 0, %s124
    %s128 = sphi 0, %s127
    %s144 = sphi 0, %s128
  $region4: #{upsample_layer_forward.5} parent=0 // loop_header_branch
    %12 = sbr.rel (%p10) target = $region8
  $region5: #{upsample_layer_forward.5} parent=0 // loop_body
    %s14 = ssub.s32 %s9, 1
    %s15 = ssub.s32 %s9, 2
    %s25 = sadd.s32 1, %s18
    %p26 = scmp.ge.s32.totalorder %s25, 1
    %s27 = scalar_select %p26, 0, %s25
    %s28 = sadd.s32 1, %s17
    %s29 = scalar_select %p26, %s28, %s17
    %p30 = scmp.ge.s32.totalorder %s29, 2
    %s31 = scalar_select %p30, 0, %s29
    %s32 = sadd.s32 1, %s16
    %s33 = scalar_select %p30, %s32, %s16
    %p34 = scmp.ge.s32.totalorder %s33, 1
    %s35 = scalar_select %p34, 0, %s33
    %s36 = ssub.s32 %s16, %s35
    %p37 = scmp.eq.s32.totalorder %s36, 0
    %s39 = sadd.s32 %s38, 1
    %s40 = scalar_select %p37, %s38, %s39
    %p43 = pneg %p37
    %p44 = scmp.eq.s32.totalorder %s9, 1
    %p45 = por %p43, %p44
    %p46 = scmp.ne.s32.totalorder %s38, %s41
    %p47 = scmp.eq.s32.totalorder %s9, 0
    %p48 = por %p46, %p47
    %p49 = scmp.ne.s32.totalorder %s38, %s41
    %p50 = scmp.eq.s32.totalorder %s14, 1
    %p51 = por %p49, %p50
    %p52 = scmp.ne.s32.totalorder %s41, %s42
    %p53 = scmp.eq.s32.totalorder %s14, 0
    %p54 = por %p52, %p53
    %p55 = scmp.ne.s32.totalorder %s41, %s42
    %p56 = scmp.eq.s32.totalorder %s15, 1
    %p57 = por %p55, %p56
    %p59 = scmp.ne.s32.totalorder %s42, %s58
    %p60 = scmp.eq.s32.totalorder %s15, 0
    %p61 = por %p59, %p60
    %s62 = ssub.s32 %s16, %s35
    %s63 = ssub.s32 %s17, %s31
    %s64 = sor.u32 %s62, %s63
    %s65 = ssub.s32 %s18, %s27
    %s66 = sor.u32 %s64, %s65
    %p67 = scmp.eq.s32.totalorder %s66, 0
    %s69 = sadd.s32 %s68, 1
    %s70 = scalar_select %p67, %s68, %s69
    %p73 = pneg %p67
    %p74 = scmp.eq.s32.totalorder %s9, 1
    %p75 = por %p73, %p74
    %p76 = scmp.ne.s32.totalorder %s68, %s71
    %p77 = scmp.eq.s32.totalorder %s9, 0
    %p78 = por %p76, %p77
    %p79 = scmp.ne.s32.totalorder %s68, %s71
    %p80 = scmp.eq.s32.totalorder %s14, 1
    %p81 = por %p79, %p80
    %p82 = scmp.ne.s32.totalorder %s71, %s72
    %p83 = scmp.eq.s32.totalorder %s14, 0
    %p84 = por %p82, %p83
    %p85 = scmp.ne.s32.totalorder %s71, %s72
    %p86 = scmp.eq.s32.totalorder %s15, 1
    %p87 = por %p85, %p86
    %p89 = scmp.ne.s32.totalorder %s72, %s88
    %p90 = scmp.eq.s32.totalorder %s15, 0
    %p91 = por %p89, %p90
    %s92 = ssub.s32 %s16, %s35
    %p93 = scmp.eq.s32.totalorder %s92, 0
    %s95 = sadd.s32 %s94, 1
    %s96 = scalar_select %p93, %s94, %s95
    %p99 = pneg %p93
    %p100 = scmp.eq.s32.totalorder %s9, 1
    %p101 = por %p99, %p100
    %p102 = scmp.ne.s32.totalorder %s94, %s97
    %p103 = scmp.eq.s32.totalorder %s9, 0
    %p104 = por %p102, %p103
    %p105 = scmp.ne.s32.totalorder %s94, %s97
    %p106 = scmp.eq.s32.totalorder %s14, 1
    %p107 = por %p105, %p106
    %p108 = scmp.ne.s32.totalorder %s97, %s98
    %p109 = scmp.eq.s32.totalorder %s14, 0
    %p110 = por %p108, %p109
    %p111 = scmp.ne.s32.totalorder %s97, %s98
    %p112 = scmp.eq.s32.totalorder %s15, 1
    %p113 = por %p111, %p112
    %p115 = scmp.ne.s32.totalorder %s98, %s114
    %p116 = scmp.eq.s32.totalorder %s15, 0
    %p117 = por %p115, %p116
    %s118 = ssub.s32 %s16, %s35
    %s119 = ssub.s32 %s17, %s31
    %s120 = sor.u32 %s118, %s119
    %s121 = ssub.s32 %s18, %s27
    %s122 = sor.u32 %s120, %s121
    %p123 = scmp.eq.s32.totalorder %s122, 0
    %s125 = sadd.s32 %s124, 1
    %s126 = scalar_select %p123, %s124, %s125
    %p129 = pneg %p123
    %p130 = scmp.eq.s32.totalorder %s9, 1
    %p131 = por %p129, %p130
    %p132 = scmp.ne.s32.totalorder %s124, %s127
    %p133 = scmp.eq.s32.totalorder %s9, 0
    %p134 = por %p132, %p133
    %p135 = scmp.ne.s32.totalorder %s124, %s127
    %p136 = scmp.eq.s32.totalorder %s14, 1
    %p137 = por %p135, %p136
    %p138 = scmp.ne.s32.totalorder %s127, %s128
    %p139 = scmp.eq.s32.totalorder %s14, 0
    %p140 = por %p138, %p139
    %p141 = scmp.ne.s32.totalorder %s127, %s128
    %p142 = scmp.eq.s32.totalorder %s15, 1
    %p143 = por %p141, %p142
    %p145 = scmp.ne.s32.totalorder %s128, %s144
    %p146 = scmp.eq.s32.totalorder %s15, 0
    %p147 = por %p145, %p146
    %p148 = scmp.le.s32.totalorder 1, %s9
    %p149 = scmp.lt.s32.totalorder %s9, 3
    %p150 = pnand %p148, %p149
    %p151 = pneg %p150
    // Predicated region
    $region9: #{upsample_layer_forward.5} parent=5 // pred_check
      _
    $region10: #{upsample_layer_forward.5} parent=5 // pred_check_branch
      %153 = sbr.rel (%p150) target = $region12
    $region11: #{upsample_layer_forward.5} parent=5 // pred_region
      %s154 = ssub.s32 %s9, 1
      // Predicated region
      $region13: #{upsample_layer_forward.5} parent=11 // pred_check
        %p155 = pneg %p54
      $region14: #{upsample_layer_forward.5} parent=11 // pred_check_branch
        %157 = sbr.rel (%p155) target = $region16
      $region15: #{upsample_layer_forward.5} parent=11 // pred_region
        %p158 = scmp.lt.s32.totalorder %s19, 0
        %s159 = scalar_select %p158, %s19, 0
        %s160 = smul.addr %s159, 4
        %s161 = smul.addr %s160, 4
        %s162 = scalar_lea.vmem %s0, %s161
      $region16: #{upsample_layer_forward.5} parent=11 // pred_fallthru
        _
      // Predicated region
      $region17: #{upsample_layer_forward.5} parent=11 // pred_check
        %p163 = pneg %p110
      $region18: #{upsample_layer_forward.5} parent=11 // pred_check_branch
        %165 = sbr.rel (%p163) target = $region20
      $region19: #{upsample_layer_forward.5} parent=11 // pred_region
        %p166 = scmp.lt.s32.totalorder %s19, 0
        %s167 = scalar_select %p166, %s19, 0
        %s168 = smul.addr %s167, 4
        %s169 = smul.addr %s168, 8
        %s170 = scalar_lea.vmem %s2, %s169
      $region20: #{upsample_layer_forward.5} parent=11 // pred_fallthru
        _
    $region12: #{upsample_layer_forward.5} parent=5 // pred_fallthru
      _
    %p171 = scmp.lt.s32.totalorder %s9, 2
    // Predicated region
    $region21: #{upsample_layer_forward.5} parent=5 // pred_check
      %p172 = pneg %p171
    $region22: #{upsample_layer_forward.5} parent=5 // pred_check_branch
      %174 = sbr.rel (%p172) target = $region24
    $region23: #{upsample_layer_forward.5} parent=5 // pred_region
      // Predicated region
      $region25: #{upsample_layer_forward.5} parent=23 // pred_check
        %p175 = pneg %p78
      $region26: #{upsample_layer_forward.5} parent=23 // pred_check_branch
        %177 = sbr.rel (%p175) target = $region28
      $region27: #{upsample_layer_forward.5} parent=23 // pred_region
        %s178 = smul.u32 2, %s18
        %p179 = scmp.lt.s32.totalorder %s16, 0
        %s180 = scalar_select %p179, %s16, 0
        %p181 = scmp.lt.s32.totalorder %s17, 1
        %s182 = scalar_select %p181, %s17, 1
        %p183 = scmp.lt.s32.totalorder %s178, 1
        %s184 = scalar_select %p183, %s178, 1
        %s185 = smul.addr %s182, 10
        %s186 = sadd.s32 %s184, %s185
        %s187 = smul.addr %s180, 20
        %s188 = sadd.s32 %s186, %s187
        %s189 = smul.addr %s188, 4
        %s190 = scalar_lea.vmem %s1, %s189
        %s191 = smul.u32 2, %s18
      $region28: #{upsample_layer_forward.5} parent=23 // pred_fallthru
        _
    $region24: #{upsample_layer_forward.5} parent=5 // pred_fallthru
      _
    %p192 = scmp.le.s32.totalorder 1, %s9
    %p193 = scmp.lt.s32.totalorder %s9, 3
    %p194 = pnand %p192, %p193
    %p195 = pneg %p194
    // Predicated region
    $region29: #{upsample_layer_forward.5} parent=5 // pred_check
      _
    $region30: #{upsample_layer_forward.5} parent=5 // pred_check_branch
      %197 = sbr.rel (%p194) target = $region32
    $region31: #{upsample_layer_forward.5} parent=5 // pred_region
      %s198 = ssub.s32 %s9, 1
      %p199 = scmp.lt.s32.totalorder %s19, 0
      %s200 = scalar_select %p199, %s19, 0
      %s201 = smul.addr %s200, 4
      %s202 = smul.addr %s201, 4
      %s203 = scalar_lea.vmem %s0, %s202
      %p204 = pneg %p54
      %p205 = pneg %p51
      %s206 = smul.u32 2, %s21
      %p207 = scmp.lt.s32.totalorder %s19, 0
      %s208 = scalar_select %p207, %s19, 0
      %p209 = scmp.lt.s32.totalorder %s20, 1
      %s210 = scalar_select %p209, %s20, 1
      %p211 = scmp.lt.s32.totalorder %s206, 1
      %s212 = scalar_select %p211, %s206, 1
      %s213 = smul.addr %s210, 10
      %s214 = sadd.s32 %s212, %s213
      %s215 = smul.addr %s208, 20
      %s216 = sadd.s32 %s214, %s215
      %s217 = smul.addr %s216, 4
      %s218 = scalar_lea.vmem %s1, %s217
      %p219 = pneg %p84
      %p220 = pneg %p81
      %p221 = scmp.lt.s32.totalorder %s19, 0
      %s222 = scalar_select %p221, %s19, 0
      %s223 = smul.addr %s222, 4
      %s224 = smul.addr %s223, 8
      %s225 = scalar_lea.vmem %s2, %s224
      %p226 = pneg %p110
      %p227 = pneg %p107
      %p228 = pneg %p140
      %p229 = pneg %p137
      %s230 = smul.u32 2, %s21
      %p231 = scmp.lt.s32.totalorder %s19, 0
      %s232 = scalar_select %p231, %s19, 0
      %p233 = scmp.lt.s32.totalorder %s20, 1
      %s234 = scalar_select %p233, %s20, 1
      %p235 = scmp.lt.s32.totalorder %s230, 1
      %s236 = scalar_select %p235, %s230, 1
      %s237 = smul.addr %s234, 8
      %s238 = sadd.s32 %s236, %s237
      %s239 = smul.addr %s232, 16
      %s240 = sadd.s32 %s238, %s239
      %s241 = smul.addr %s240, 8
      %s242 = scalar_lea.vmem %s3, %s241
      %p243 = scmp.lt.s32.totalorder %s19, 0
      %s244 = scalar_select %p243, %s19, 0
      %s245 = smul.addr %s244, 4
      %s246 = smul.addr %s245, 4
      %s247 = scalar_lea.vmem %s0, %s246
      %s248 = smul.u32 2, %s21
      %p249 = scmp.lt.s32.totalorder %s19, 0
      %s250 = scalar_select %p249, %s19, 0
      %p251 = scmp.lt.s32.totalorder %s20, 1
      %s252 = scalar_select %p251, %s20, 1
      %p253 = scmp.lt.s32.totalorder %s248, 1
      %s254 = scalar_select %p253, %s248, 1
      %s255 = smul.addr %s252, 10
      %s256 = sadd.s32 %s254, %s255
      %s257 = smul.addr %s250, 20
      %s258 = sadd.s32 %s256, %s257
      %s259 = smul.addr %s258, 4
      %s260 = scalar_lea.vmem %s1, %s259
      %s261 = smul.u32 2, %s21
      %p262 = scmp.lt.s32.totalorder %s19, 0
      %s263 = scalar_select %p262, %s19, 0
      %s264 = smul.addr %s263, 4
      %s265 = smul.addr %s264, 8
      %s266 = scalar_lea.vmem %s2, %s265
      %s267 = smul.u32 2, %s21
      %p268 = scmp.lt.s32.totalorder %s19, 0
      %s269 = scalar_select %p268, %s19, 0
      %p270 = scmp.lt.s32.totalorder %s20, 1
      %s271 = scalar_select %p270, %s20, 1
      %p272 = scmp.lt.s32.totalorder %s267, 1
      %s273 = scalar_select %p272, %s267, 1
      %s274 = smul.addr %s271, 8
      %s275 = sadd.s32 %s273, %s274
      %s276 = smul.addr %s269, 16
      %s277 = sadd.s32 %s275, %s276
      %s278 = smul.addr %s277, 8
      %s279 = scalar_lea.vmem %s3, %s278
      %s280 = smul.u32 2, %s21
      %v282 = vld [vmem:[%s247] sm:$0xf]
      %v283 = vld [vmem:[%s247 + $0x4] sm:$0xf]
      %v284 = vld [vmem:[%s247 + $0x8] sm:$0xf]
      %v285 = vld [vmem:[%s247 + $0xc] sm:$0x3]
      %v286 = vld [vmem:[%s260] sm:$0xff]
      %v287 = vld [vmem:[%s260 + $0x8] sm:$0xff]
      %v288 = vld [vmem:[%s260 + $0x10] sm:$0xff]
      %v289 = vld [vmem:[%s260 + $0x18] sm:$0xff]
      %v290 = vld [vmem:[%s260 + $0x20] sm:$0x33]
      %v291 = vld [vmem:[%s266] sm:$0xff]
      %v292 = vld [vmem:[%s266 + $0x8] sm:$0xff]
      %v293 = vld [vmem:[%s266 + $0x10] sm:$0xff]
      %v294 = vld [vmem:[%s266 + $0x18] sm:$0x7]
      %296 = vset.pattern.permute.xlu0 0
      %297 = vperm.xlu0 %296, %v291
      %v298 = vpop.permute.xlu0 %297
      %301 = vset.pattern.permute.xlu0 0
      %302 = vperm.xlu0 %301, %v292
      %v303 = vpop.permute.xlu0 %302
      %306 = vset.pattern.permute.xlu0 0
      %307 = vperm.xlu0 %306, %v293
      %v308 = vpop.permute.xlu0 %307
      %311 = vset.pattern.permute.xlu0 0
      %312 = vperm.xlu0 %311, %v294
      %v313 = vpop.permute.xlu0 %312
      %v319 = vunpack.c.l.b16 %v282
      %v320 = vunpack.c.l.b16 %v283
      %v321 = vunpack.c.l.b16 %v284
      %v322 = vunpack.c.l.b16 %v285
      %v323 = vpack.c.b16 %v320, %v319
      %v324 = vpack.c.b16 %v322, %v321
      %v330 = vunpack.c.l.b16 %v286
      %v331 = vunpack.c.h.b16 %v286
      %v332 = vunpack.c.l.b16 %v287
      %v333 = vunpack.c.h.b16 %v287
      %v334 = vunpack.c.l.b16 %v288
      %v335 = vunpack.c.h.b16 %v288
      %v336 = vunpack.c.l.b16 %v289
      %v337 = vunpack.c.h.b16 %v289
      %v338 = vunpack.c.l.b16 %v290
      %v339 = vunpack.c.h.b16 %v290
      %v340 = vpack.c.b16 %v332, %v330
      %v341 = vpack.c.b16 %v333, %v331
      %v342 = vpack.c.b16 %v336, %v334
      %v343 = vpack.c.b16 %v337, %v335
      %v344 = vpack.c.b16 %v338, %v338
      %v345 = vpack.c.b16 %v339, %v339
      %vm350 = vcmask 293888
      %v352 = vsel %vm350, %v323, 0
      %v355 = vsel %vm350, %v324, 0
      %vm357 = vcmask 1041408
      %v359 = vsel %vm357, %v344, 0
      %v362 = vsel %vm357, %v345, 0
      %364 = vmatprep.subr.bf16.mxu0 %v341
      %365 = vmatpush1.bf16.msra.mxu0 %v340
      %366 = vmatprep.subr.bf16.mxu0 %v343
      %367 = vmatpush1.bf16.msra.mxu0 %v342
      %368 = vmatprep.subr.bf16.mxu0 %v362
      %369 = vmatpush1.bf16.msra.mxu0 %v359
      %370 = vmatprep.subr.bf16.mxu0 0
      %371 = vmatpush1.bf16.msra.mxu0 0
      %372 = vmatprep.subr.bf16.mxu0 0
      %373 = vmatpush1.bf16.msra.mxu0 0
      %374 = vmatprep.subr.bf16.mxu0 0
      %375 = vmatpush1.bf16.msra.mxu0 0
      %376 = vmatprep.subr.bf16.mxu0 0
      %377 = vmatpush1.bf16.msra.mxu0 0
      %378 = vmatprep.subr.bf16.mxu0 0
      %379 = vmatpush1.bf16.msra.mxu0 0
      %380 = vmatprep.subr.bf16.mxu0 0
      %381 = vmatpush1.bf16.msra.mxu0 0
      %382 = vmatprep.subr.bf16.mxu0 0
      %383 = vmatpush1.bf16.msra.mxu0 0
      %384 = vmatprep.subr.bf16.mxu0 0
      %385 = vmatpush1.bf16.msra.mxu0 0
      %386 = vmatprep.subr.bf16.mxu0 0
      %387 = vmatpush1.bf16.msra.mxu0 0
      %388 = vmatprep.subr.bf16.mxu0 0
      %389 = vmatpush1.bf16.msra.mxu0 0
      %390 = vmatprep.subr.bf16.mxu0 0
      %391 = vmatpush1.bf16.msra.mxu0 0
      %392 = vmatprep.subr.bf16.mxu0 0
      %393 = vmatpush1.bf16.msra.mxu0 0
      %394 = vmatprep.subr.bf16.mxu0 0
      %395 = vmatpush1.bf16.msra.mxu0 0
      %396 = vmatprep.mubr.bf16.mxu0 0
      %397 = vmatmul.mubr.bf16.gmra.mrb[0].mxu0 %v352
      %v398 = vpop.f32.mrb[0].mxu0
      %v399 = vadd.f32 %v298, %v398
      %v400 = vpop.f32.mrb[0].mxu0
      %v401 = vadd.f32 %v298, %v400
      %v402 = vpop.f32.mrb[0].mxu0
      %v403 = vadd.f32 %v303, %v402
      %v404 = vpop.f32.mrb[0].mxu0
      %v405 = vadd.f32 %v303, %v404
      %406 = vmatprep.mubr.bf16.mxu0 0
      %407 = vmatmul.mubr.bf16.gmra.mrb[0].mxu0 %v355
      %v408 = vpop.f32.mrb[0].mxu0
      %v409 = vadd.f32 %v308, %v408
      %v410 = vpop.f32.mrb[0].mxu0
      %v411 = vadd.f32 %v308, %v410
      %v412 = vpop.f32.mrb[0].mxu0
      %v413 = vadd.f32 %v313, %v412
      %v414 = vpop.f32.mrb[0].mxu0
      %v415 = vadd.f32 %v313, %v414
      %416 = vdwg.mxu0
      %v417 = vlaneseq
      %v418 = vshrl.u32 %v417, 7
      %v419 = vadd.s32 %v418, 8
      %v420 = vadd.s32 %v418, 16
      %v421 = vadd.s32 %v418, 24
      %vm422 = vcmp.ge.s32.totalorder %v418, 18
      %vm423 = vcmp.ge.s32.totalorder %v419, 18
      %vm424 = vcmp.ge.s32.totalorder %v420, 18
      %vm425 = vcmp.ge.s32.totalorder %v421, 18
      %v426 = vsub.f32 0.0, %v399
      %v427 = vsub.f32 0.0, %v401
      %v428 = vsub.f32 0.0, %v403
      %v429 = vsub.f32 0.0, %v405
      %v430 = vsub.f32 0.0, %v409
      %v431 = vsub.f32 0.0, %v411
      %v432 = vsub.f32 0.0, %v413
      %v433 = vsub.f32 0.0, %v415
      %v434 = vmul.f32 %v426, 1.442695
      %v435 = vpow.pop %v434
      %v436 = vmul.f32 %v427, 1.442695
      %v437 = vpow.pop %v436
      %v438 = vmul.f32 %v428, 1.442695
      %v439 = vpow.pop %v438
      %v440 = vmul.f32 %v429, 1.442695
      %v441 = vpow.pop %v440
      %v442 = vmul.f32 %v430, 1.442695
      %v443 = vpow.pop %v442
      %v444 = vmul.f32 %v431, 1.442695
      %v445 = vpow.pop %v444
      %v446 = vmul.f32 %v432, 1.442695
      %v447 = vpow.pop %v446
      %v448 = vmul.f32 %v433, 1.442695
      %v449 = vpow.pop %v448
      %v450 = vadd.f32 %v435, 1.0
      %v451 = vadd.f32 %v437, 1.0
      %v452 = vadd.f32 %v439, 1.0
      %v453 = vadd.f32 %v441, 1.0
      %v454 = vadd.f32 %v443, 1.0
      %v455 = vadd.f32 %v445, 1.0
      %v456 = vadd.f32 %v447, 1.0
      %v457 = vadd.f32 %v449, 1.0
      %v458 = vrcp.pop %v450
      %v459 = vmul.f32 1.0, %v458
      %v460 = vrcp.pop %v451
      %v461 = vmul.f32 1.0, %v460
      %v462 = vrcp.pop %v452
      %v463 = vmul.f32 1.0, %v462
      %v464 = vrcp.pop %v453
      %v465 = vmul.f32 1.0, %v464
      %v466 = vrcp.pop %v454
      %v467 = vmul.f32 1.0, %v466
      %v468 = vrcp.pop %v455
      %v469 = vmul.f32 1.0, %v468
      %v470 = vrcp.pop %v456
      %v471 = vmul.f32 1.0, %v470
      %v472 = vrcp.pop %v457
      %v473 = vmul.f32 1.0, %v472
      %v474 = vsel %vm422, %v459, %v399
      %v475 = vsel %vm422, %v461, %v401
      %v476 = vsel %vm423, %v463, %v403
      %v477 = vsel %vm423, %v465, %v405
      %v478 = vsel %vm424, %v467, %v409
      %v479 = vsel %vm424, %v469, %v411
      %v480 = vsel %vm425, %v471, %v413
      %v481 = vsel %vm425, %v473, %v415
      %482 = vst [vmem:[%s279] sm:$0xff] %v474
      %483 = vst [vmem:[%s279 + $0x8] sm:$0xff] %v475
      %484 = vst [vmem:[%s279 + $0x10] sm:$0xff] %v476
      %485 = vst [vmem:[%s279 + $0x18] sm:$0xff] %v477
      %486 = vst [vmem:[%s279 + $0x20] sm:$0xff] %v478
      %487 = vst [vmem:[%s279 + $0x28] sm:$0xff] %v479
      %488 = vst [vmem:[%s279 + $0x30] sm:$0x7] %v480
      %489 = vst [vmem:[%s279 + $0x38] sm:$0x7] %v481
      %s490 = smul.u32 2, %s21
      %p491 = scmp.lt.s32.totalorder %s19, 0
      %s492 = scalar_select %p491, %s19, 0
      %p493 = scmp.lt.s32.totalorder %s20, 1
      %s494 = scalar_select %p493, %s20, 1
      %p495 = scmp.lt.s32.totalorder %s490, 1
      %s496 = scalar_select %p495, %s490, 1
      %s497 = smul.addr %s494, 8
      %s498 = sadd.s32 %s496, %s497
      %s499 = smul.addr %s492, 16
      %s500 = sadd.s32 %s498, %s499
      %s501 = smul.addr %s500, 8
      %s502 = scalar_lea.vmem %s3, %s501
      // Predicated region
      $region33: #{upsample_layer_forward.5} parent=31 // pred_check
        %p503 = pneg %p137
      $region34: #{upsample_layer_forward.5} parent=31 // pred_check_branch
        %505 = sbr.rel (%p503) target = $region36
      $region35: #{upsample_layer_forward.5} parent=31 // pred_region
        %s506 = smul.u32 2, %s21
      $region36: #{upsample_layer_forward.5} parent=31 // pred_fallthru
        _
    $region32: #{upsample_layer_forward.5} parent=5 // pred_fallthru
      _
    %p507 = scmp.le.s32.totalorder 2, %s9
    // Predicated region
    $region37: #{upsample_layer_forward.5} parent=5 // pred_check
      %p508 = pneg %p507
    $region38: #{upsample_layer_forward.5} parent=5 // pred_check_branch
      %510 = sbr.rel (%p508) target = $region40
    $region39: #{upsample_layer_forward.5} parent=5 // pred_region
      %s511 = ssub.s32 %s9, 2
      // Predicated region
      $region41: #{upsample_layer_forward.5} parent=39 // pred_check
        %p512 = pneg %p143
      $region42: #{upsample_layer_forward.5} parent=39 // pred_check_branch
        %514 = sbr.rel (%p512) target = $region44
      $region43: #{upsample_layer_forward.5} parent=39 // pred_region
        %s515 = smul.u32 2, %s24
        %p516 = scmp.lt.s32.totalorder %s22, 0
        %s517 = scalar_select %p516, %s22, 0
        %p518 = scmp.lt.s32.totalorder %s23, 1
        %s519 = scalar_select %p518, %s23, 1
        %p520 = scmp.lt.s32.totalorder %s515, 1
        %s521 = scalar_select %p520, %s515, 1
        %s522 = smul.addr %s519, 8
        %s523 = sadd.s32 %s521, %s522
        %s524 = smul.addr %s517, 16
        %s525 = sadd.s32 %s523, %s524
        %s526 = smul.addr %s525, 8
        %s527 = scalar_lea.vmem %s3, %s526
      $region44: #{upsample_layer_forward.5} parent=39 // pred_fallthru
        _
    $region40: #{upsample_layer_forward.5} parent=5 // pred_fallthru
      _
  $region6: #{upsample_layer_forward.5} parent=0 // loop_footer
    %s13 = sadd.s32 1, %s9
  $region7: #{upsample_layer_forward.5} parent=0 // loop_footer_branch
    %8 = sbr.rel target = $region3
  $region8: #{upsample_layer_forward.5} parent=0 // loop_exit
    _

// kernel: upsample_layer_forward.6
$region0: #{upsample_layer_forward.6}
  #allocation0 [shape = 'u32[]', space=smem, size = 0x4, offset = 0x4, fixed_abs, tag = 'smem constant byte address 0x4 - core index']
  #allocation1 [shape = 'u32[144,128]{1,0:T(1,128)}', space=vmem, size = 0x12000, scoped, tag = 'internal scratch']
  %s0 = inlined_call_operand.vmem [shape: bf16[1,8,36], index: 0, kind: input, shape index: {}]
  %s1 = inlined_call_operand.vmem [shape: bf16[1,2,36,256], index: 1, kind: input, shape index: {}]
  %s2 = inlined_call_operand.vmem [shape: f32[1,8,1], index: 2, kind: input, shape index: {}]
  %s3 = inlined_call_operand.vmem [shape: f32[1,2,8,256], index: 3, kind: output, shape index: {}]
  %s4 = sld [smem:[#allocation0]]
  $region45: #{upsample_layer_forward.6} parent=0
    _
  %s6 = ssub.s32 1, %s4
  %s7 = scalar_select 0, %s6, %s4
  loop: start=0, step=1, limit=4
  $region2: #{upsample_layer_forward.6} parent=0 // loop_pre_header
    _
  $region3: #{upsample_layer_forward.6} parent=0 // loop_header
    %s9 = sphi 0, %s13
    %p10 = scmp.ge.s32.totalorder %s9, 4
    %s16 = sphi 0, %s35
    %s17 = sphi 0, %s31
    %s18 = sphi 0, %s27
    %s19 = sphi 0, %s16
    %s20 = sphi 0, %s17
    %s21 = sphi 0, %s18
    %s22 = sphi 0, %s19
    %s23 = sphi 0, %s20
    %s24 = sphi 0, %s21
    %s38 = sphi 0, %s40
    %s41 = sphi 0, %s38
    %s42 = sphi 0, %s41
    %s58 = sphi 0, %s42
    %s68 = sphi 0, %s70
    %s71 = sphi 0, %s68
    %s72 = sphi 0, %s71
    %s88 = sphi 0, %s72
    %s94 = sphi 0, %s96
    %s97 = sphi 0, %s94
    %s98 = sphi 0, %s97
    %s114 = sphi 0, %s98
    %s124 = sphi 0, %s126
    %s127 = sphi 0, %s124
    %s128 = sphi 0, %s127
    %s144 = sphi 0, %s128
  $region4: #{upsample_layer_forward.6} parent=0 // loop_header_branch
    %12 = sbr.rel (%p10) target = $region8
  $region5: #{upsample_layer_forward.6} parent=0 // loop_body
    %s14 = ssub.s32 %s9, 1
    %s15 = ssub.s32 %s9, 2
    %s25 = sadd.s32 1, %s18
    %p26 = scmp.ge.s32.totalorder %s25, 1
    %s27 = scalar_select %p26, 0, %s25
    %s28 = sadd.s32 1, %s17
    %s29 = scalar_select %p26, %s28, %s17
    %p30 = scmp.ge.s32.totalorder %s29, 2
    %s31 = scalar_select %p30, 0, %s29
    %s32 = sadd.s32 1, %s16
    %s33 = scalar_select %p30, %s32, %s16
    %p34 = scmp.ge.s32.totalorder %s33, 1
    %s35 = scalar_select %p34, 0, %s33
    %s36 = ssub.s32 %s16, %s35
    %p37 = scmp.eq.s32.totalorder %s36, 0
    %s39 = sadd.s32 %s38, 1
    %s40 = scalar_select %p37, %s38, %s39
    %p43 = pneg %p37
    %p44 = scmp.eq.s32.totalorder %s9, 1
    %p45 = por %p43, %p44
    %p46 = scmp.ne.s32.totalorder %s38, %s41
    %p47 = scmp.eq.s32.totalorder %s9, 0
    %p48 = por %p46, %p47
    %p49 = scmp.ne.s32.totalorder %s38, %s41
    %p50 = scmp.eq.s32.totalorder %s14, 1
    %p51 = por %p49, %p50
    %p52 = scmp.ne.s32.totalorder %s41, %s42
    %p53 = scmp.eq.s32.totalorder %s14, 0
    %p54 = por %p52, %p53
    %p55 = scmp.ne.s32.totalorder %s41, %s42
    %p56 = scmp.eq.s32.totalorder %s15, 1
    %p57 = por %p55, %p56
    %p59 = scmp.ne.s32.totalorder %s42, %s58
    %p60 = scmp.eq.s32.totalorder %s15, 0
    %p61 = por %p59, %p60
    %s62 = ssub.s32 %s16, %s35
    %s63 = ssub.s32 %s17, %s31
    %s64 = sor.u32 %s62, %s63
    %s65 = ssub.s32 %s18, %s27
    %s66 = sor.u32 %s64, %s65
    %p67 = scmp.eq.s32.totalorder %s66, 0
    %s69 = sadd.s32 %s68, 1
    %s70 = scalar_select %p67, %s68, %s69
    %p73 = pneg %p67
    %p74 = scmp.eq.s32.totalorder %s9, 1
    %p75 = por %p73, %p74
    %p76 = scmp.ne.s32.totalorder %s68, %s71
    %p77 = scmp.eq.s32.totalorder %s9, 0
    %p78 = por %p76, %p77
    %p79 = scmp.ne.s32.totalorder %s68, %s71
    %p80 = scmp.eq.s32.totalorder %s14, 1
    %p81 = por %p79, %p80
    %p82 = scmp.ne.s32.totalorder %s71, %s72
    %p83 = scmp.eq.s32.totalorder %s14, 0
    %p84 = por %p82, %p83
    %p85 = scmp.ne.s32.totalorder %s71, %s72
    %p86 = scmp.eq.s32.totalorder %s15, 1
    %p87 = por %p85, %p86
    %p89 = scmp.ne.s32.totalorder %s72, %s88
    %p90 = scmp.eq.s32.totalorder %s15, 0
    %p91 = por %p89, %p90
    %s92 = ssub.s32 %s16, %s35
    %p93 = scmp.eq.s32.totalorder %s92, 0
    %s95 = sadd.s32 %s94, 1
    %s96 = scalar_select %p93, %s94, %s95
    %p99 = pneg %p93
    %p100 = scmp.eq.s32.totalorder %s9, 1
    %p101 = por %p99, %p100
    %p102 = scmp.ne.s32.totalorder %s94, %s97
    %p103 = scmp.eq.s32.totalorder %s9, 0
    %p104 = por %p102, %p103
    %p105 = scmp.ne.s32.totalorder %s94, %s97
    %p106 = scmp.eq.s32.totalorder %s14, 1
    %p107 = por %p105, %p106
    %p108 = scmp.ne.s32.totalorder %s97, %s98
    %p109 = scmp.eq.s32.totalorder %s14, 0
    %p110 = por %p108, %p109
    %p111 = scmp.ne.s32.totalorder %s97, %s98
    %p112 = scmp.eq.s32.totalorder %s15, 1
    %p113 = por %p111, %p112
    %p115 = scmp.ne.s32.totalorder %s98, %s114
    %p116 = scmp.eq.s32.totalorder %s15, 0
    %p117 = por %p115, %p116
    %s118 = ssub.s32 %s16, %s35
    %s119 = ssub.s32 %s17, %s31
    %s120 = sor.u32 %s118, %s119
    %s121 = ssub.s32 %s18, %s27
    %s122 = sor.u32 %s120, %s121
    %p123 = scmp.eq.s32.totalorder %s122, 0
    %s125 = sadd.s32 %s124, 1
    %s126 = scalar_select %p123, %s124, %s125
    %p129 = pneg %p123
    %p130 = scmp.eq.s32.totalorder %s9, 1
    %p131 = por %p129, %p130
    %p132 = scmp.ne.s32.totalorder %s124, %s127
    %p133 = scmp.eq.s32.totalorder %s9, 0
    %p134 = por %p132, %p133
    %p135 = scmp.ne.s32.totalorder %s124, %s127
    %p136 = scmp.eq.s32.totalorder %s14, 1
    %p137 = por %p135, %p136
    %p138 = scmp.ne.s32.totalorder %s127, %s128
    %p139 = scmp.eq.s32.totalorder %s14, 0
    %p140 = por %p138, %p139
    %p141 = scmp.ne.s32.totalorder %s127, %s128
    %p142 = scmp.eq.s32.totalorder %s15, 1
    %p143 = por %p141, %p142
    %p145 = scmp.ne.s32.totalorder %s128, %s144
    %p146 = scmp.eq.s32.totalorder %s15, 0
    %p147 = por %p145, %p146
    %p148 = scmp.le.s32.totalorder 1, %s9
    %p149 = scmp.lt.s32.totalorder %s9, 3
    %p150 = pnand %p148, %p149
    %p151 = pneg %p150
    // Predicated region
    $region9: #{upsample_layer_forward.6} parent=5 // pred_check
      _
    $region10: #{upsample_layer_forward.6} parent=5 // pred_check_branch
      %153 = sbr.rel (%p150) target = $region12
    $region11: #{upsample_layer_forward.6} parent=5 // pred_region
      %s154 = ssub.s32 %s9, 1
      // Predicated region
      $region13: #{upsample_layer_forward.6} parent=11 // pred_check
        %p155 = pneg %p54
      $region14: #{upsample_layer_forward.6} parent=11 // pred_check_branch
        %157 = sbr.rel (%p155) target = $region16
      $region15: #{upsample_layer_forward.6} parent=11 // pred_region
        %p158 = scmp.lt.s32.totalorder %s19, 0
        %s159 = scalar_select %p158, %s19, 0
        %s160 = smul.addr %s159, 4
        %s161 = scalar_lea.vmem %s0, %s160
      $region16: #{upsample_layer_forward.6} parent=11 // pred_fallthru
        _
      // Predicated region
      $region17: #{upsample_layer_forward.6} parent=11 // pred_check
        %p162 = pneg %p110
      $region18: #{upsample_layer_forward.6} parent=11 // pred_check_branch
        %164 = sbr.rel (%p162) target = $region20
      $region19: #{upsample_layer_forward.6} parent=11 // pred_region
        %p165 = scmp.lt.s32.totalorder %s19, 0
        %s166 = scalar_select %p165, %s19, 0
        %s167 = smul.addr %s166, 8
        %s168 = scalar_lea.vmem %s2, %s167
      $region20: #{upsample_layer_forward.6} parent=11 // pred_fallthru
        _
    $region12: #{upsample_layer_forward.6} parent=5 // pred_fallthru
      _
    %p169 = scmp.lt.s32.totalorder %s9, 2
    // Predicated region
    $region21: #{upsample_layer_forward.6} parent=5 // pred_check
      %p170 = pneg %p169
    $region22: #{upsample_layer_forward.6} parent=5 // pred_check_branch
      %172 = sbr.rel (%p170) target = $region24
    $region23: #{upsample_layer_forward.6} parent=5 // pred_region
      // Predicated region
      $region25: #{upsample_layer_forward.6} parent=23 // pred_check
        %p173 = pneg %p78
      $region26: #{upsample_layer_forward.6} parent=23 // pred_check_branch
        %175 = sbr.rel (%p173) target = $region28
      $region27: #{upsample_layer_forward.6} parent=23 // pred_region
        %s176 = smul.u32 2, %s18
        %p177 = scmp.lt.s32.totalorder %s16, 0
        %s178 = scalar_select %p177, %s16, 0
        %p179 = scmp.lt.s32.totalorder %s17, 1
        %s180 = scalar_select %p179, %s17, 1
        %p181 = scmp.lt.s32.totalorder %s176, 1
        %s182 = scalar_select %p181, %s176, 1
        %s183 = smul.addr %s180, 10
        %s184 = sadd.s32 %s182, %s183
        %s185 = smul.addr %s178, 20
        %s186 = sadd.s32 %s184, %s185
        %s187 = smul.addr %s186, 4
        %s188 = scalar_lea.vmem %s1, %s187
        %s189 = smul.u32 2, %s18
      $region28: #{upsample_layer_forward.6} parent=23 // pred_fallthru
        _
    $region24: #{upsample_layer_forward.6} parent=5 // pred_fallthru
      _
    %p190 = scmp.le.s32.totalorder 1, %s9
    %p191 = scmp.lt.s32.totalorder %s9, 3
    %p192 = pnand %p190, %p191
    %p193 = pneg %p192
    // Predicated region
    $region29: #{upsample_layer_forward.6} parent=5 // pred_check
      _
    $region30: #{upsample_layer_forward.6} parent=5 // pred_check_branch
      %195 = sbr.rel (%p192) target = $region32
    $region31: #{upsample_layer_forward.6} parent=5 // pred_region
      %s196 = ssub.s32 %s9, 1
      %p197 = scmp.lt.s32.totalorder %s19, 0
      %s198 = scalar_select %p197, %s19, 0
      %s199 = smul.addr %s198, 4
      %s200 = scalar_lea.vmem %s0, %s199
      %p201 = pneg %p54
      %p202 = pneg %p51
      %s203 = smul.u32 2, %s21
      %p204 = scmp.lt.s32.totalorder %s19, 0
      %s205 = scalar_select %p204, %s19, 0
      %p206 = scmp.lt.s32.totalorder %s20, 1
      %s207 = scalar_select %p206, %s20, 1
      %p208 = scmp.lt.s32.totalorder %s203, 1
      %s209 = scalar_select %p208, %s203, 1
      %s210 = smul.addr %s207, 10
      %s211 = sadd.s32 %s209, %s210
      %s212 = smul.addr %s205, 20
      %s213 = sadd.s32 %s211, %s212
      %s214 = smul.addr %s213, 4
      %s215 = scalar_lea.vmem %s1, %s214
      %p216 = pneg %p84
      %p217 = pneg %p81
      %p218 = scmp.lt.s32.totalorder %s19, 0
      %s219 = scalar_select %p218, %s19, 0
      %s220 = smul.addr %s219, 8
      %s221 = scalar_lea.vmem %s2, %s220
      %p222 = pneg %p110
      %p223 = pneg %p107
      %p224 = pneg %p140
      %p225 = pneg %p137
      %s226 = smul.u32 2, %s21
      %p227 = scmp.lt.s32.totalorder %s19, 0
      %s228 = scalar_select %p227, %s19, 0
      %p229 = scmp.lt.s32.totalorder %s20, 1
      %s230 = scalar_select %p229, %s20, 1
      %p231 = scmp.lt.s32.totalorder %s226, 1
      %s232 = scalar_select %p231, %s226, 1
      %s233 = smul.addr %s230, 2
      %s234 = sadd.s32 %s232, %s233
      %s235 = smul.addr %s228, 4
      %s236 = sadd.s32 %s234, %s235
      %s237 = smul.addr %s236, 8
      %s238 = scalar_lea.vmem %s3, %s237
      %p239 = scmp.lt.s32.totalorder %s19, 0
      %s240 = scalar_select %p239, %s19, 0
      %s241 = smul.addr %s240, 4
      %s242 = scalar_lea.vmem %s0, %s241
      %s243 = smul.u32 2, %s21
      %p244 = scmp.lt.s32.totalorder %s19, 0
      %s245 = scalar_select %p244, %s19, 0
      %p246 = scmp.lt.s32.totalorder %s20, 1
      %s247 = scalar_select %p246, %s20, 1
      %p248 = scmp.lt.s32.totalorder %s243, 1
      %s249 = scalar_select %p248, %s243, 1
      %s250 = smul.addr %s247, 10
      %s251 = sadd.s32 %s249, %s250
      %s252 = smul.addr %s245, 20
      %s253 = sadd.s32 %s251, %s252
      %s254 = smul.addr %s253, 4
      %s255 = scalar_lea.vmem %s1, %s254
      %s256 = smul.u32 2, %s21
      %p257 = scmp.lt.s32.totalorder %s19, 0
      %s258 = scalar_select %p257, %s19, 0
      %s259 = smul.addr %s258, 8
      %s260 = scalar_lea.vmem %s2, %s259
      %s261 = smul.u32 2, %s21
      %p262 = scmp.lt.s32.totalorder %s19, 0
      %s263 = scalar_select %p262, %s19, 0
      %p264 = scmp.lt.s32.totalorder %s20, 1
      %s265 = scalar_select %p264, %s20, 1
      %p266 = scmp.lt.s32.totalorder %s261, 1
      %s267 = scalar_select %p266, %s261, 1
      %s268 = smul.addr %s265, 2
      %s269 = sadd.s32 %s267, %s268
      %s270 = smul.addr %s263, 4
      %s271 = sadd.s32 %s269, %s270
      %s272 = smul.addr %s271, 8
      %s273 = scalar_lea.vmem %s3, %s272
      %s274 = smul.u32 2, %s21
      %v276 = vld [vmem:[%s242] sm:$0xf]
      %v277 = vld [vmem:[%s255] sm:$0xff]
      %v278 = vld [vmem:[%s255 + $0x8] sm:$0xff]
      %v279 = vld [vmem:[%s255 + $0x10] sm:$0xff]
      %v280 = vld [vmem:[%s255 + $0x18] sm:$0xff]
      %v281 = vld [vmem:[%s255 + $0x20] sm:$0x33]
      %v282 = vld [vmem:[%s260] sm:$0xff]
      %284 = vset.pattern.permute.xlu0 0
      %285 = vperm.xlu0 %284, %v282
      %v286 = vpop.permute.xlu0 %285
      %v293 = vunpack.c.l.b16 %v277
      %v294 = vunpack.c.h.b16 %v277
      %v295 = vunpack.c.l.b16 %v278
      %v296 = vunpack.c.h.b16 %v278
      %v297 = vunpack.c.l.b16 %v279
      %v298 = vunpack.c.h.b16 %v279
      %v299 = vunpack.c.l.b16 %v280
      %v300 = vunpack.c.h.b16 %v280
      %v301 = vunpack.c.l.b16 %v281
      %v302 = vunpack.c.h.b16 %v281
      %v303 = vpack.c.b16 %v295, %v293
      %v304 = vpack.c.b16 %v296, %v294
      %v305 = vpack.c.b16 %v299, %v297
      %v306 = vpack.c.b16 %v300, %v298
      %v307 = vpack.c.b16 %v301, %v301
      %v308 = vpack.c.b16 %v302, %v302
      %vm313 = vcmask 293888
      %v315 = vsel %vm313, %v276, 0
      %vm317 = vcmask 1041408
      %v319 = vsel %vm317, %v307, 0
      %v322 = vsel %vm317, %v308, 0
      %324 = vmatprep.subr.bf16.mxu0 %v304
      %325 = vmatpush1.bf16.msra.mxu0 %v303
      %326 = vmatprep.subr.bf16.mxu0 %v306
      %327 = vmatpush1.bf16.msra.mxu0 %v305
      %328 = vmatprep.subr.bf16.mxu0 %v322
      %329 = vmatpush1.bf16.msra.mxu0 %v319
      %330 = vmatprep.subr.bf16.mxu0 0
      %331 = vmatpush1.bf16.msra.mxu0 0
      %332 = vmatprep.subr.bf16.mxu0 0
      %333 = vmatpush1.bf16.msra.mxu0 0
      %334 = vmatprep.subr.bf16.mxu0 0
      %335 = vmatpush1.bf16.msra.mxu0 0
      %336 = vmatprep.subr.bf16.mxu0 0
      %337 = vmatpush1.bf16.msra.mxu0 0
      %338 = vmatprep.subr.bf16.mxu0 0
      %339 = vmatpush1.bf16.msra.mxu0 0
      %340 = vmatprep.subr.bf16.mxu0 0
      %341 = vmatpush1.bf16.msra.mxu0 0
      %342 = vmatprep.subr.bf16.mxu0 0
      %343 = vmatpush1.bf16.msra.mxu0 0
      %344 = vmatprep.subr.bf16.mxu0 0
      %345 = vmatpush1.bf16.msra.mxu0 0
      %346 = vmatprep.subr.bf16.mxu0 0
      %347 = vmatpush1.bf16.msra.mxu0 0
      %348 = vmatprep.subr.bf16.mxu0 0
      %349 = vmatpush1.bf16.msra.mxu0 0
      %350 = vmatprep.subr.bf16.mxu0 0
      %351 = vmatpush1.bf16.msra.mxu0 0
      %352 = vmatprep.subr.bf16.mxu0 0
      %353 = vmatpush1.bf16.msra.mxu0 0
      %354 = vmatprep.subr.bf16.mxu0 0
      %355 = vmatpush1.bf16.msra.mxu0 0
      %356 = vmatprep.mubr.bf16.mxu0 0
      %357 = vmatmul.mubr.bf16.gmra.mrb[0].mxu0 %v315
      %v358 = vpop.f32.mrb[0].mxu0
      %v359 = vadd.f32 %v286, %v358
      %v360 = vpop.f32.mrb[0].mxu0
      %v361 = vadd.f32 %v286, %v360
      %v362 = vpop.f32.mrb[0].mxu0
      %v363 = vpop.f32.mrb[0].mxu0
      %364 = vdwg.mxu0
      %365 = vst [vmem:[%s273] sm:$0xff] %v359
      %366 = vst [vmem:[%s273 + $0x8] sm:$0xff] %v361
      %s367 = smul.u32 2, %s21
      %p368 = scmp.lt.s32.totalorder %s19, 0
      %s369 = scalar_select %p368, %s19, 0
      %p370 = scmp.lt.s32.totalorder %s20, 1
      %s371 = scalar_select %p370, %s20, 1
      %p372 = scmp.lt.s32.totalorder %s367, 1
      %s373 = scalar_select %p372, %s367, 1
      %s374 = smul.addr %s371, 2
      %s375 = sadd.s32 %s373, %s374
      %s376 = smul.addr %s369, 4
      %s377 = sadd.s32 %s375, %s376
      %s378 = smul.addr %s377, 8
      %s379 = scalar_lea.vmem %s3, %s378
      // Predicated region
      $region33: #{upsample_layer_forward.6} parent=31 // pred_check
        %p380 = pneg %p137
      $region34: #{upsample_layer_forward.6} parent=31 // pred_check_branch
        %382 = sbr.rel (%p380) target = $region36
      $region35: #{upsample_layer_forward.6} parent=31 // pred_region
        %s383 = smul.u32 2, %s21
      $region36: #{upsample_layer_forward.6} parent=31 // pred_fallthru
        _
    $region32: #{upsample_layer_forward.6} parent=5 // pred_fallthru
      _
    %p384 = scmp.le.s32.totalorder 2, %s9
    // Predicated region
    $region37: #{upsample_layer_forward.6} parent=5 // pred_check
      %p385 = pneg %p384
    $region38: #{upsample_layer_forward.6} parent=5 // pred_check_branch
      %387 = sbr.rel (%p385) target = $region40
    $region39: #{upsample_layer_forward.6} parent=5 // pred_region
      %s388 = ssub.s32 %s9, 2
      // Predicated region
      $region41: #{upsample_layer_forward.6} parent=39 // pred_check
        %p389 = pneg %p143
      $region42: #{upsample_layer_forward.6} parent=39 // pred_check_branch
        %391 = sbr.rel (%p389) target = $region44
      $region43: #{upsample_layer_forward.6} parent=39 // pred_region
        %s392 = smul.u32 2, %s24
        %p393 = scmp.lt.s32.totalorder %s22, 0
        %s394 = scalar_select %p393, %s22, 0
        %p395 = scmp.lt.s32.totalorder %s23, 1
        %s396 = scalar_select %p395, %s23, 1
        %p397 = scmp.lt.s32.totalorder %s392, 1
        %s398 = scalar_select %p397, %s392, 1
        %s399 = smul.addr %s396, 2
        %s400 = sadd.s32 %s398, %s399
        %s401 = smul.addr %s394, 4
        %s402 = sadd.s32 %s400, %s401
        %s403 = smul.addr %s402, 8
        %s404 = scalar_lea.vmem %s3, %s403
      $region44: #{upsample_layer_forward.6} parent=39 // pred_fallthru
        _
    $region40: #{upsample_layer_forward.6} parent=5 // pred_fallthru
      _
  $region6: #{upsample_layer_forward.6} parent=0 // loop_footer
    %s13 = sadd.s32 1, %s9
  $region7: #{upsample_layer_forward.6} parent=0 // loop_footer_branch
    %8 = sbr.rel target = $region3
  $region8: #{upsample_layer_forward.6} parent=0 // loop_exit
    _

// kernel: upsample_layer_forward.7
$region0: #{upsample_layer_forward.7}
  #allocation0 [shape = 'u32[]', space=smem, size = 0x4, offset = 0x4, fixed_abs, tag = 'smem constant byte address 0x4 - core index']
  #allocation1 [shape = 'u32[144,128]{1,0:T(1,128)}', space=vmem, size = 0x12000, scoped, tag = 'internal scratch']
  %s0 = inlined_call_operand.vmem [shape: f32[2,8,256], index: 0, kind: input, shape index: {}]
  %s1 = inlined_call_operand.vmem [shape: f32[8,1], index: 1, kind: input, shape index: {}]
  %s2 = inlined_call_operand.vmem [shape: f32[8,1], index: 2, kind: input, shape index: {}]
  %s3 = inlined_call_operand.vmem [shape: f32[2,8,256], index: 3, kind: output, shape index: {}]
  %s4 = sld [smem:[#allocation0]]
  $region45: #{upsample_layer_forward.7} parent=0
    _
  %s6 = ssub.s32 1, %s4
  %s7 = scalar_select 0, %s6, %s4
  loop: start=0, step=1, limit=4
  $region2: #{upsample_layer_forward.7} parent=0 // loop_pre_header
    _
  $region3: #{upsample_layer_forward.7} parent=0 // loop_header
    %s9 = sphi 0, %s13
    %p10 = scmp.ge.s32.totalorder %s9, 4
    %s16 = sphi 0, %s28
    %s17 = sphi 0, %s24
    %s18 = sphi 0, %s16
    %s19 = sphi 0, %s17
    %s20 = sphi 0, %s18
    %s21 = sphi 0, %s19
    %s33 = sphi 0, %s35
    %s36 = sphi 0, %s33
    %s37 = sphi 0, %s36
    %s53 = sphi 0, %s37
    %s57 = sphi 0, %s57
    %s59 = sphi 0, %s57
    %s60 = sphi 0, %s59
    %s74 = sphi 0, %s60
    %s78 = sphi 0, %s78
    %s80 = sphi 0, %s78
    %s81 = sphi 0, %s80
    %s95 = sphi 0, %s81
    %s103 = sphi 0, %s105
    %s106 = sphi 0, %s103
    %s107 = sphi 0, %s106
    %s123 = sphi 0, %s107
  $region4: #{upsample_layer_forward.7} parent=0 // loop_header_branch
    %12 = sbr.rel (%p10) target = $region8
  $region5: #{upsample_layer_forward.7} parent=0 // loop_body
    %s14 = ssub.s32 %s9, 1
    %s15 = ssub.s32 %s9, 2
    %s22 = sadd.s32 1, %s17
    %p23 = scmp.ge.s32.totalorder %s22, 1
    %s24 = scalar_select %p23, 0, %s22
    %s25 = sadd.s32 1, %s16
    %s26 = scalar_select %p23, %s25, %s16
    %p27 = scmp.ge.s32.totalorder %s26, 2
    %s28 = scalar_select %p27, 0, %s26
    %s29 = ssub.s32 %s16, %s28
    %s30 = ssub.s32 %s17, %s24
    %s31 = sor.u32 %s29, %s30
    %p32 = scmp.eq.s32.totalorder %s31, 0
    %s34 = sadd.s32 %s33, 1
    %s35 = scalar_select %p32, %s33, %s34
    %p38 = pneg %p32
    %p39 = scmp.eq.s32.totalorder %s9, 1
    %p40 = por %p38, %p39
    %p41 = scmp.ne.s32.totalorder %s33, %s36
    %p42 = scmp.eq.s32.totalorder %s9, 0
    %p43 = por %p41, %p42
    %p44 = scmp.ne.s32.totalorder %s33, %s36
    %p45 = scmp.eq.s32.totalorder %s14, 1
    %p46 = por %p44, %p45
    %p47 = scmp.ne.s32.totalorder %s36, %s37
    %p48 = scmp.eq.s32.totalorder %s14, 0
    %p49 = por %p47, %p48
    %p50 = scmp.ne.s32.totalorder %s36, %s37
    %p51 = scmp.eq.s32.totalorder %s15, 1
    %p52 = por %p50, %p51
    %p54 = scmp.ne.s32.totalorder %s37, %s53
    %p55 = scmp.eq.s32.totalorder %s15, 0
    %p56 = por %p54, %p55
    %s58 = sadd.s32 %s57, 1
    %p61 = scmp.eq.s32.totalorder %s9, 1
    %p62 = scmp.ne.s32.totalorder %s57, %s59
    %p63 = scmp.eq.s32.totalorder %s9, 0
    %p64 = por %p62, %p63
    %p65 = scmp.ne.s32.totalorder %s57, %s59
    %p66 = scmp.eq.s32.totalorder %s14, 1
    %p67 = por %p65, %p66
    %p68 = scmp.ne.s32.totalorder %s59, %s60
    %p69 = scmp.eq.s32.totalorder %s14, 0
    %p70 = por %p68, %p69
    %p71 = scmp.ne.s32.totalorder %s59, %s60
    %p72 = scmp.eq.s32.totalorder %s15, 1
    %p73 = por %p71, %p72
    %p75 = scmp.ne.s32.totalorder %s60, %s74
    %p76 = scmp.eq.s32.totalorder %s15, 0
    %p77 = por %p75, %p76
    %s79 = sadd.s32 %s78, 1
    %p82 = scmp.eq.s32.totalorder %s9, 1
    %p83 = scmp.ne.s32.totalorder %s78, %s80
    %p84 = scmp.eq.s32.totalorder %s9, 0
    %p85 = por %p83, %p84
    %p86 = scmp.ne.s32.totalorder %s78, %s80
    %p87 = scmp.eq.s32.totalorder %s14, 1
    %p88 = por %p86, %p87
    %p89 = scmp.ne.s32.totalorder %s80, %s81
    %p90 = scmp.eq.s32.totalorder %s14, 0
    %p91 = por %p89, %p90
    %p92 = scmp.ne.s32.totalorder %s80, %s81
    %p93 = scmp.eq.s32.totalorder %s15, 1
    %p94 = por %p92, %p93
    %p96 = scmp.ne.s32.totalorder %s81, %s95
    %p97 = scmp.eq.s32.totalorder %s15, 0
    %p98 = por %p96, %p97
    %s99 = ssub.s32 %s16, %s28
    %s100 = ssub.s32 %s17, %s24
    %s101 = sor.u32 %s99, %s100
    %p102 = scmp.eq.s32.totalorder %s101, 0
    %s104 = sadd.s32 %s103, 1
    %s105 = scalar_select %p102, %s103, %s104
    %p108 = pneg %p102
    %p109 = scmp.eq.s32.totalorder %s9, 1
    %p110 = por %p108, %p109
    %p111 = scmp.ne.s32.totalorder %s103, %s106
    %p112 = scmp.eq.s32.totalorder %s9, 0
    %p113 = por %p111, %p112
    %p114 = scmp.ne.s32.totalorder %s103, %s106
    %p115 = scmp.eq.s32.totalorder %s14, 1
    %p116 = por %p114, %p115
    %p117 = scmp.ne.s32.totalorder %s106, %s107
    %p118 = scmp.eq.s32.totalorder %s14, 0
    %p119 = por %p117, %p118
    %p120 = scmp.ne.s32.totalorder %s106, %s107
    %p121 = scmp.eq.s32.totalorder %s15, 1
    %p122 = por %p120, %p121
    %p124 = scmp.ne.s32.totalorder %s107, %s123
    %p125 = scmp.eq.s32.totalorder %s15, 0
    %p126 = por %p124, %p125
    %p127 = scmp.le.s32.totalorder 1, %s9
    %p128 = scmp.lt.s32.totalorder %s9, 3
    %p129 = pnand %p127, %p128
    %p130 = pneg %p129
    // Predicated region
    $region9: #{upsample_layer_forward.7} parent=5 // pred_check
      _
    $region10: #{upsample_layer_forward.7} parent=5 // pred_check_branch
      %132 = sbr.rel (%p129) target = $region12
    $region11: #{upsample_layer_forward.7} parent=5 // pred_region
      %s133 = ssub.s32 %s9, 1
      // Predicated region
      $region13: #{upsample_layer_forward.7} parent=11 // pred_check
        %p134 = pneg %p70
      $region14: #{upsample_layer_forward.7} parent=11 // pred_check_branch
        %136 = sbr.rel (%p134) target = $region16
      $region15: #{upsample_layer_forward.7} parent=11 // pred_region
        _
      $region16: #{upsample_layer_forward.7} parent=11 // pred_fallthru
        _
      // Predicated region
      $region17: #{upsample_layer_forward.7} parent=11 // pred_check
        %p137 = pneg %p91
      $region18: #{upsample_layer_forward.7} parent=11 // pred_check_branch
        %139 = sbr.rel (%p137) target = $region20
      $region19: #{upsample_layer_forward.7} parent=11 // pred_region
        _
      $region20: #{upsample_layer_forward.7} parent=11 // pred_fallthru
        _
    $region12: #{upsample_layer_forward.7} parent=5 // pred_fallthru
      _
    %p140 = scmp.lt.s32.totalorder %s9, 2
    // Predicated region
    $region21: #{upsample_layer_forward.7} parent=5 // pred_check
      %p141 = pneg %p140
    $region22: #{upsample_layer_forward.7} parent=5 // pred_check_branch
      %143 = sbr.rel (%p141) target = $region24
    $region23: #{upsample_layer_forward.7} parent=5 // pred_region
      // Predicated region
      $region25: #{upsample_layer_forward.7} parent=23 // pred_check
        %p144 = pneg %p43
      $region26: #{upsample_layer_forward.7} parent=23 // pred_check_branch
        %146 = sbr.rel (%p144) target = $region28
      $region27: #{upsample_layer_forward.7} parent=23 // pred_region
        %s147 = smul.u32 2, %s17
        %p148 = scmp.lt.s32.totalorder %s16, 1
        %s149 = scalar_select %p148, %s16, 1
        %p150 = scmp.lt.s32.totalorder %s147, 1
        %s151 = scalar_select %p150, %s147, 1
        %s152 = smul.addr %s149, 2
        %s153 = sadd.s32 %s151, %s152
        %s154 = smul.addr %s153, 8
        %s155 = scalar_lea.vmem %s0, %s154
        %s156 = smul.u32 2, %s17
      $region28: #{upsample_layer_forward.7} parent=23 // pred_fallthru
        _
    $region24: #{upsample_layer_forward.7} parent=5 // pred_fallthru
      _
    %p157 = scmp.le.s32.totalorder 1, %s9
    %p158 = scmp.lt.s32.totalorder %s9, 3
    %p159 = pnand %p157, %p158
    %p160 = pneg %p159
    // Predicated region
    $region29: #{upsample_layer_forward.7} parent=5 // pred_check
      _
    $region30: #{upsample_layer_forward.7} parent=5 // pred_check_branch
      %162 = sbr.rel (%p159) target = $region32
    $region31: #{upsample_layer_forward.7} parent=5 // pred_region
      %s163 = ssub.s32 %s9, 1
      %s164 = smul.u32 2, %s19
      %p165 = scmp.lt.s32.totalorder %s18, 1
      %s166 = scalar_select %p165, %s18, 1
      %p167 = scmp.lt.s32.totalorder %s164, 1
      %s168 = scalar_select %p167, %s164, 1
      %s169 = smul.addr %s166, 2
      %s170 = sadd.s32 %s168, %s169
      %s171 = smul.addr %s170, 8
      %s172 = scalar_lea.vmem %s0, %s171
      %p173 = pneg %p49
      %p174 = pneg %p46
      %p175 = pneg %p70
      %p176 = pneg %p67
      %p177 = pneg %p91
      %p178 = pneg %p88
      %p179 = pneg %p119
      %p180 = pneg %p116
      %s181 = smul.u32 2, %s19
      %p182 = scmp.lt.s32.totalorder %s18, 1
      %s183 = scalar_select %p182, %s18, 1
      %p184 = scmp.lt.s32.totalorder %s181, 1
      %s185 = scalar_select %p184, %s181, 1
      %s186 = smul.addr %s183, 2
      %s187 = sadd.s32 %s185, %s186
      %s188 = smul.addr %s187, 8
      %s189 = scalar_lea.vmem %s3, %s188
      %s190 = smul.u32 2, %s19
      %p191 = scmp.lt.s32.totalorder %s18, 1
      %s192 = scalar_select %p191, %s18, 1
      %p193 = scmp.lt.s32.totalorder %s190, 1
      %s194 = scalar_select %p193, %s190, 1
      %s195 = smul.addr %s192, 2
      %s196 = sadd.s32 %s194, %s195
      %s197 = smul.addr %s196, 8
      %s198 = scalar_lea.vmem %s0, %s197
      %s199 = smul.u32 2, %s19
      %s200 = smul.u32 2, %s19
      %p201 = scmp.lt.s32.totalorder %s18, 1
      %s202 = scalar_select %p201, %s18, 1
      %p203 = scmp.lt.s32.totalorder %s200, 1
      %s204 = scalar_select %p203, %s200, 1
      %s205 = smul.addr %s202, 2
      %s206 = sadd.s32 %s204, %s205
      %s207 = smul.addr %s206, 8
      %s208 = scalar_lea.vmem %s3, %s207
      %s209 = smul.u32 2, %s19
      %v210 = vld [vmem:[%s198] sm:$0xff]
      %v211 = vld [vmem:[%s198 + $0x8] sm:$0xff]
      %v212 = vld [vmem:[%s1] sm:$0xff]
      %214 = vset.pattern.permute.xlu0 0
      %215 = vperm.xlu0 %214, %v212
      %v216 = vpop.permute.xlu0 %215
      %v218 = vmul.f32 %v210, %v216
      %v219 = vmul.f32 %v211, %v216
      %v220 = vld [vmem:[%s2] sm:$0xff]
      %222 = vset.pattern.permute.xlu0 0
      %223 = vperm.xlu0 %222, %v220
      %v224 = vpop.permute.xlu0 %223
      %v226 = vadd.f32 %v218, %v224
      %v227 = vadd.f32 %v219, %v224
      %v228 = vmax.f32 %v226, 0.0
      %v229 = vmax.f32 %v227, 0.0
      %230 = vst [vmem:[%s208] sm:$0xff] %v228
      %231 = vst [vmem:[%s208 + $0x8] sm:$0xff] %v229
      %s232 = smul.u32 2, %s19
      %p233 = scmp.lt.s32.totalorder %s18, 1
      %s234 = scalar_select %p233, %s18, 1
      %p235 = scmp.lt.s32.totalorder %s232, 1
      %s236 = scalar_select %p235, %s232, 1
      %s237 = smul.addr %s234, 2
      %s238 = sadd.s32 %s236, %s237
      %s239 = smul.addr %s238, 8
      %s240 = scalar_lea.vmem %s3, %s239
      // Predicated region
      $region33: #{upsample_layer_forward.7} parent=31 // pred_check
        %p241 = pneg %p116
      $region34: #{upsample_layer_forward.7} parent=31 // pred_check_branch
        %243 = sbr.rel (%p241) target = $region36
      $region35: #{upsample_layer_forward.7} parent=31 // pred_region
        %s244 = smul.u32 2, %s19
      $region36: #{upsample_layer_forward.7} parent=31 // pred_fallthru
        _
    $region32: #{upsample_layer_forward.7} parent=5 // pred_fallthru
      _
    %p245 = scmp.le.s32.totalorder 2, %s9
    // Predicated region
    $region37: #{upsample_layer_forward.7} parent=5 // pred_check
      %p246 = pneg %p245
    $region38: #{upsample_layer_forward.7} parent=5 // pred_check_branch
      %248 = sbr.rel (%p246) target = $region40
    $region39: #{upsample_layer_forward.7} parent=5 // pred_region
      %s249 = ssub.s32 %s9, 2
      // Predicated region
      $region41: #{upsample_layer_forward.7} parent=39 // pred_check
        %p250 = pneg %p122
      $region42: #{upsample_layer_forward.7} parent=39 // pred_check_branch
        %252 = sbr.rel (%p250) target = $region44
      $region43: #{upsample_layer_forward.7} parent=39 // pred_region
        %s253 = smul.u32 2, %s21
        %p254 = scmp.lt.s32.totalorder %s20, 1
        %s255 = scalar_select %p254, %s20, 1
        %p256 = scmp.lt.s32.totalorder %s253, 1
        %s257 = scalar_select %p256, %s253, 1
        %s258 = smul.addr %s255, 2
        %s259 = sadd.s32 %s257, %s258
        %s260 = smul.addr %s259, 8
        %s261 = scalar_lea.vmem %s3, %s260
      $region44: #{upsample_layer_forward.7} parent=39 // pred_fallthru
        _
    $region40: #{upsample_layer_forward.7} parent=5 // pred_fallthru
      _
  $region6: #{upsample_layer_forward.7} parent=0 // loop_footer
    %s13 = sadd.s32 1, %s9
  $region7: #{upsample_layer_forward.7} parent=0 // loop_footer_branch
    %8 = sbr.rel target = $region3
  $region8: #{upsample_layer_forward.7} parent=0 // loop_exit
    _

// kernel: upsample_layer_forward.8
$region0: #{upsample_layer_forward.8}
  #allocation0 [shape = 'u32[]', space=smem, size = 0x4, offset = 0x4, fixed_abs, tag = 'smem constant byte address 0x4 - core index']
  #allocation1 [shape = 'u32[144,128]{1,0:T(1,128)}', space=vmem, size = 0x12000, scoped, tag = 'internal scratch']
  %s0 = inlined_call_operand.vmem [shape: bf16[4,8,32], index: 0, kind: input, shape index: {}]
  %s1 = inlined_call_operand.vmem [shape: bf16[4,2,32,256], index: 1, kind: input, shape index: {}]
  %s2 = inlined_call_operand.vmem [shape: f32[4,8,1], index: 2, kind: input, shape index: {}]
  %s3 = inlined_call_operand.vmem [shape: f32[4,2,8,256], index: 3, kind: output, shape index: {}]
  %s4 = sld [smem:[#allocation0]]
  $region45: #{upsample_layer_forward.8} parent=0
    _
  %s6 = ssub.s32 1, %s4
  %s7 = scalar_select 0, %s6, %s4
  loop: start=0, step=1, limit=10
  $region2: #{upsample_layer_forward.8} parent=0 // loop_pre_header
    _
  $region3: #{upsample_layer_forward.8} parent=0 // loop_header
    %s9 = sphi 0, %s13
    %p10 = scmp.ge.s32.totalorder %s9, 10
    %s16 = sphi 0, %s35
    %s17 = sphi 0, %s31
    %s18 = sphi 0, %s27
    %s19 = sphi 0, %s16
    %s20 = sphi 0, %s17
    %s21 = sphi 0, %s18
    %s22 = sphi 0, %s19
    %s23 = sphi 0, %s20
    %s24 = sphi 0, %s21
    %s38 = sphi 0, %s40
    %s41 = sphi 0, %s38
    %s42 = sphi 0, %s41
    %s58 = sphi 0, %s42
    %s68 = sphi 0, %s70
    %s71 = sphi 0, %s68
    %s72 = sphi 0, %s71
    %s88 = sphi 0, %s72
    %s94 = sphi 0, %s96
    %s97 = sphi 0, %s94
    %s98 = sphi 0, %s97
    %s114 = sphi 0, %s98
    %s124 = sphi 0, %s126
    %s127 = sphi 0, %s124
    %s128 = sphi 0, %s127
    %s144 = sphi 0, %s128
  $region4: #{upsample_layer_forward.8} parent=0 // loop_header_branch
    %12 = sbr.rel (%p10) target = $region8
  $region5: #{upsample_layer_forward.8} parent=0 // loop_body
    %s14 = ssub.s32 %s9, 1
    %s15 = ssub.s32 %s9, 2
    %s25 = sadd.s32 1, %s18
    %p26 = scmp.ge.s32.totalorder %s25, 1
    %s27 = scalar_select %p26, 0, %s25
    %s28 = sadd.s32 1, %s17
    %s29 = scalar_select %p26, %s28, %s17
    %p30 = scmp.ge.s32.totalorder %s29, 2
    %s31 = scalar_select %p30, 0, %s29
    %s32 = sadd.s32 1, %s16
    %s33 = scalar_select %p30, %s32, %s16
    %p34 = scmp.ge.s32.totalorder %s33, 4
    %s35 = scalar_select %p34, 0, %s33
    %s36 = ssub.s32 %s16, %s35
    %p37 = scmp.eq.s32.totalorder %s36, 0
    %s39 = sadd.s32 %s38, 1
    %s40 = scalar_select %p37, %s38, %s39
    %p43 = pneg %p37
    %p44 = scmp.eq.s32.totalorder %s9, 7
    %p45 = por %p43, %p44
    %p46 = scmp.ne.s32.totalorder %s38, %s41
    %p47 = scmp.eq.s32.totalorder %s9, 0
    %p48 = por %p46, %p47
    %p49 = scmp.ne.s32.totalorder %s38, %s41
    %p50 = scmp.eq.s32.totalorder %s14, 7
    %p51 = por %p49, %p50
    %p52 = scmp.ne.s32.totalorder %s41, %s42
    %p53 = scmp.eq.s32.totalorder %s14, 0
    %p54 = por %p52, %p53
    %p55 = scmp.ne.s32.totalorder %s41, %s42
    %p56 = scmp.eq.s32.totalorder %s15, 7
    %p57 = por %p55, %p56
    %p59 = scmp.ne.s32.totalorder %s42, %s58
    %p60 = scmp.eq.s32.totalorder %s15, 0
    %p61 = por %p59, %p60
    %s62 = ssub.s32 %s16, %s35
    %s63 = ssub.s32 %s17, %s31
    %s64 = sor.u32 %s62, %s63
    %s65 = ssub.s32 %s18, %s27
    %s66 = sor.u32 %s64, %s65
    %p67 = scmp.eq.s32.totalorder %s66, 0
    %s69 = sadd.s32 %s68, 1
    %s70 = scalar_select %p67, %s68, %s69
    %p73 = pneg %p67
    %p74 = scmp.eq.s32.totalorder %s9, 7
    %p75 = por %p73, %p74
    %p76 = scmp.ne.s32.totalorder %s68, %s71
    %p77 = scmp.eq.s32.totalorder %s9, 0
    %p78 = por %p76, %p77
    %p79 = scmp.ne.s32.totalorder %s68, %s71
    %p80 = scmp.eq.s32.totalorder %s14, 7
    %p81 = por %p79, %p80
    %p82 = scmp.ne.s32.totalorder %s71, %s72
    %p83 = scmp.eq.s32.totalorder %s14, 0
    %p84 = por %p82, %p83
    %p85 = scmp.ne.s32.totalorder %s71, %s72
    %p86 = scmp.eq.s32.totalorder %s15, 7
    %p87 = por %p85, %p86
    %p89 = scmp.ne.s32.totalorder %s72, %s88
    %p90 = scmp.eq.s32.totalorder %s15, 0
    %p91 = por %p89, %p90
    %s92 = ssub.s32 %s16, %s35
    %p93 = scmp.eq.s32.totalorder %s92, 0
    %s95 = sadd.s32 %s94, 1
    %s96 = scalar_select %p93, %s94, %s95
    %p99 = pneg %p93
    %p100 = scmp.eq.s32.totalorder %s9, 7
    %p101 = por %p99, %p100
    %p102 = scmp.ne.s32.totalorder %s94, %s97
    %p103 = scmp.eq.s32.totalorder %s9, 0
    %p104 = por %p102, %p103
    %p105 = scmp.ne.s32.totalorder %s94, %s97
    %p106 = scmp.eq.s32.totalorder %s14, 7
    %p107 = por %p105, %p106
    %p108 = scmp.ne.s32.totalorder %s97, %s98
    %p109 = scmp.eq.s32.totalorder %s14, 0
    %p110 = por %p108, %p109
    %p111 = scmp.ne.s32.totalorder %s97, %s98
    %p112 = scmp.eq.s32.totalorder %s15, 7
    %p113 = por %p111, %p112
    %p115 = scmp.ne.s32.totalorder %s98, %s114
    %p116 = scmp.eq.s32.totalorder %s15, 0
    %p117 = por %p115, %p116
    %s118 = ssub.s32 %s16, %s35
    %s119 = ssub.s32 %s17, %s31
    %s120 = sor.u32 %s118, %s119
    %s121 = ssub.s32 %s18, %s27
    %s122 = sor.u32 %s120, %s121
    %p123 = scmp.eq.s32.totalorder %s122, 0
    %s125 = sadd.s32 %s124, 1
    %s126 = scalar_select %p123, %s124, %s125
    %p129 = pneg %p123
    %p130 = scmp.eq.s32.totalorder %s9, 7
    %p131 = por %p129, %p130
    %p132 = scmp.ne.s32.totalorder %s124, %s127
    %p133 = scmp.eq.s32.totalorder %s9, 0
    %p134 = por %p132, %p133
    %p135 = scmp.ne.s32.totalorder %s124, %s127
    %p136 = scmp.eq.s32.totalorder %s14, 7
    %p137 = por %p135, %p136
    %p138 = scmp.ne.s32.totalorder %s127, %s128
    %p139 = scmp.eq.s32.totalorder %s14, 0
    %p140 = por %p138, %p139
    %p141 = scmp.ne.s32.totalorder %s127, %s128
    %p142 = scmp.eq.s32.totalorder %s15, 7
    %p143 = por %p141, %p142
    %p145 = scmp.ne.s32.totalorder %s128, %s144
    %p146 = scmp.eq.s32.totalorder %s15, 0
    %p147 = por %p145, %p146
    %p148 = scmp.le.s32.totalorder 1, %s9
    %p149 = scmp.lt.s32.totalorder %s9, 9
    %p150 = pnand %p148, %p149
    %p151 = pneg %p150
    // Predicated region
    $region9: #{upsample_layer_forward.8} parent=5 // pred_check
      _
    $region10: #{upsample_layer_forward.8} parent=5 // pred_check_branch
      %153 = sbr.rel (%p150) target = $region12
    $region11: #{upsample_layer_forward.8} parent=5 // pred_region
      %s154 = ssub.s32 %s9, 1
    $region12: #{upsample_layer_forward.8} parent=5 // pred_fallthru
      _
    %p155 = scmp.lt.s32.totalorder %s9, 8
    // Predicated region
    $region13: #{upsample_layer_forward.8} parent=5 // pred_check
      %p156 = pneg %p155
    $region14: #{upsample_layer_forward.8} parent=5 // pred_check_branch
      %158 = sbr.rel (%p156) target = $region16
    $region15: #{upsample_layer_forward.8} parent=5 // pred_region
      // Predicated region
      $region17: #{upsample_layer_forward.8} parent=15 // pred_check
        %p159 = pneg %p48
      $region18: #{upsample_layer_forward.8} parent=15 // pred_check_branch
        %161 = sbr.rel (%p159) target = $region20
      $region19: #{upsample_layer_forward.8} parent=15 // pred_region
        %p162 = scmp.lt.s32.totalorder %s16, 3
        %s163 = scalar_select %p162, %s16, 3
        %s164 = smul.addr %s163, 4
        %s165 = scalar_lea.vmem %s0, %s164
      $region20: #{upsample_layer_forward.8} parent=15 // pred_fallthru
        _
      // Predicated region
      $region21: #{upsample_layer_forward.8} parent=15 // pred_check
        %p166 = pneg %p78
      $region22: #{upsample_layer_forward.8} parent=15 // pred_check_branch
        %168 = sbr.rel (%p166) target = $region24
      $region23: #{upsample_layer_forward.8} parent=15 // pred_region
        %s169 = smul.u32 2, %s18
        %p170 = scmp.lt.s32.totalorder %s16, 3
        %s171 = scalar_select %p170, %s16, 3
        %p172 = scmp.lt.s32.totalorder %s17, 1
        %s173 = scalar_select %p172, %s17, 1
        %p174 = scmp.lt.s32.totalorder %s169, 1
        %s175 = scalar_select %p174, %s169, 1
        %s176 = smul.addr %s173, 8
        %s177 = sadd.s32 %s175, %s176
        %s178 = smul.addr %s171, 16
        %s179 = sadd.s32 %s177, %s178
        %s180 = smul.addr %s179, 4
        %s181 = scalar_lea.vmem %s1, %s180
        %s182 = smul.u32 2, %s18
      $region24: #{upsample_layer_forward.8} parent=15 // pred_fallthru
        _
      // Predicated region
      $region25: #{upsample_layer_forward.8} parent=15 // pred_check
        %p183 = pneg %p104
      $region26: #{upsample_layer_forward.8} parent=15 // pred_check_branch
        %185 = sbr.rel (%p183) target = $region28
      $region27: #{upsample_layer_forward.8} parent=15 // pred_region
        %p186 = scmp.lt.s32.totalorder %s16, 3
        %s187 = scalar_select %p186, %s16, 3
        %s188 = smul.addr %s187, 8
        %s189 = scalar_lea.vmem %s2, %s188
      $region28: #{upsample_layer_forward.8} parent=15 // pred_fallthru
        _
    $region16: #{upsample_layer_forward.8} parent=5 // pred_fallthru
      _
    %p190 = scmp.le.s32.totalorder 1, %s9
    %p191 = scmp.lt.s32.totalorder %s9, 9
    %p192 = pnand %p190, %p191
    %p193 = pneg %p192
    // Predicated region
    $region29: #{upsample_layer_forward.8} parent=5 // pred_check
      _
    $region30: #{upsample_layer_forward.8} parent=5 // pred_check_branch
      %195 = sbr.rel (%p192) target = $region32
    $region31: #{upsample_layer_forward.8} parent=5 // pred_region
      %s196 = ssub.s32 %s9, 1
      %p197 = scmp.lt.s32.totalorder %s19, 3
      %s198 = scalar_select %p197, %s19, 3
      %s199 = smul.addr %s198, 4
      %s200 = scalar_lea.vmem %s0, %s199
      %p201 = pneg %p54
      %p202 = pneg %p51
      %s203 = smul.u32 2, %s21
      %p204 = scmp.lt.s32.totalorder %s19, 3
      %s205 = scalar_select %p204, %s19, 3
      %p206 = scmp.lt.s32.totalorder %s20, 1
      %s207 = scalar_select %p206, %s20, 1
      %p208 = scmp.lt.s32.totalorder %s203, 1
      %s209 = scalar_select %p208, %s203, 1
      %s210 = smul.addr %s207, 8
      %s211 = sadd.s32 %s209, %s210
      %s212 = smul.addr %s205, 16
      %s213 = sadd.s32 %s211, %s212
      %s214 = smul.addr %s213, 4
      %s215 = scalar_lea.vmem %s1, %s214
      %p216 = pneg %p84
      %p217 = pneg %p81
      %p218 = scmp.lt.s32.totalorder %s19, 3
      %s219 = scalar_select %p218, %s19, 3
      %s220 = smul.addr %s219, 8
      %s221 = scalar_lea.vmem %s2, %s220
      %p222 = pneg %p110
      %p223 = pneg %p107
      %p224 = pneg %p140
      %p225 = pneg %p137
      %s226 = smul.u32 2, %s21
      %p227 = scmp.lt.s32.totalorder %s19, 3
      %s228 = scalar_select %p227, %s19, 3
      %p229 = scmp.lt.s32.totalorder %s20, 1
      %s230 = scalar_select %p229, %s20, 1
      %p231 = scmp.lt.s32.totalorder %s226, 1
      %s232 = scalar_select %p231, %s226, 1
      %s233 = smul.addr %s230, 2
      %s234 = sadd.s32 %s232, %s233
      %s235 = smul.addr %s228, 4
      %s236 = sadd.s32 %s234, %s235
      %s237 = smul.addr %s236, 8
      %s238 = scalar_lea.vmem %s3, %s237
      %p239 = scmp.lt.s32.totalorder %s19, 3
      %s240 = scalar_select %p239, %s19, 3
      %s241 = smul.addr %s240, 4
      %s242 = scalar_lea.vmem %s0, %s241
      %s243 = smul.u32 2, %s21
      %p244 = scmp.lt.s32.totalorder %s19, 3
      %s245 = scalar_select %p244, %s19, 3
      %p246 = scmp.lt.s32.totalorder %s20, 1
      %s247 = scalar_select %p246, %s20, 1
      %p248 = scmp.lt.s32.totalorder %s243, 1
      %s249 = scalar_select %p248, %s243, 1
      %s250 = smul.addr %s247, 8
      %s251 = sadd.s32 %s249, %s250
      %s252 = smul.addr %s245, 16
      %s253 = sadd.s32 %s251, %s252
      %s254 = smul.addr %s253, 4
      %s255 = scalar_lea.vmem %s1, %s254
      %s256 = smul.u32 2, %s21
      %p257 = scmp.lt.s32.totalorder %s19, 3
      %s258 = scalar_select %p257, %s19, 3
      %s259 = smul.addr %s258, 8
      %s260 = scalar_lea.vmem %s2, %s259
      %s261 = smul.u32 2, %s21
      %p262 = scmp.lt.s32.totalorder %s19, 3
      %s263 = scalar_select %p262, %s19, 3
      %p264 = scmp.lt.s32.totalorder %s20, 1
      %s265 = scalar_select %p264, %s20, 1
      %p266 = scmp.lt.s32.totalorder %s261, 1
      %s267 = scalar_select %p266, %s261, 1
      %s268 = smul.addr %s265, 2
      %s269 = sadd.s32 %s267, %s268
      %s270 = smul.addr %s263, 4
      %s271 = sadd.s32 %s269, %s270
      %s272 = smul.addr %s271, 8
      %s273 = scalar_lea.vmem %s3, %s272
      %s274 = smul.u32 2, %s21
      %v276 = vld [vmem:[%s242] sm:$0xf]
      %v277 = vld [vmem:[%s255] sm:$0xff]
      %v278 = vld [vmem:[%s255 + $0x8] sm:$0xff]
      %v279 = vld [vmem:[%s255 + $0x10] sm:$0xff]
      %v280 = vld [vmem:[%s255 + $0x18] sm:$0xff]
      %v285 = vunpack.c.l.b16 %v277
      %v286 = vunpack.c.h.b16 %v277
      %v287 = vunpack.c.l.b16 %v278
      %v288 = vunpack.c.h.b16 %v278
      %v289 = vunpack.c.l.b16 %v279
      %v290 = vunpack.c.h.b16 %v279
      %v291 = vunpack.c.l.b16 %v280
      %v292 = vunpack.c.h.b16 %v280
      %v293 = vpack.c.b16 %v287, %v285
      %v294 = vpack.c.b16 %v288, %v286
      %v295 = vpack.c.b16 %v291, %v289
      %v296 = vpack.c.b16 %v292, %v290
      %vm301 = vcmask 261120
      %v303 = vsel %vm301, %v276, 0
      %305 = vmatprep.subr.bf16.mxu0 %v294
      %306 = vmatpush1.bf16.msra.mxu0 %v293
      %307 = vmatprep.subr.bf16.mxu0 %v296
      %308 = vmatpush1.bf16.msra.mxu0 %v295
      %309 = vmatprep.subr.bf16.mxu0 0
      %310 = vmatpush1.bf16.msra.mxu0 0
      %311 = vmatprep.subr.bf16.mxu0 0
      %312 = vmatpush1.bf16.msra.mxu0 0
      %313 = vmatprep.subr.bf16.mxu0 0
      %314 = vmatpush1.bf16.msra.mxu0 0
      %315 = vmatprep.subr.bf16.mxu0 0
      %316 = vmatpush1.bf16.msra.mxu0 0
      %317 = vmatprep.subr.bf16.mxu0 0
      %318 = vmatpush1.bf16.msra.mxu0 0
      %319 = vmatprep.subr.bf16.mxu0 0
      %320 = vmatpush1.bf16.msra.mxu0 0
      %321 = vmatprep.subr.bf16.mxu0 0
      %322 = vmatpush1.bf16.msra.mxu0 0
      %323 = vmatprep.subr.bf16.mxu0 0
      %324 = vmatpush1.bf16.msra.mxu0 0
      %325 = vmatprep.subr.bf16.mxu0 0
      %326 = vmatpush1.bf16.msra.mxu0 0
      %327 = vmatprep.subr.bf16.mxu0 0
      %328 = vmatpush1.bf16.msra.mxu0 0
      %329 = vmatprep.subr.bf16.mxu0 0
      %330 = vmatpush1.bf16.msra.mxu0 0
      %331 = vmatprep.subr.bf16.mxu0 0
      %332 = vmatpush1.bf16.msra.mxu0 0
      %333 = vmatprep.subr.bf16.mxu0 0
      %334 = vmatpush1.bf16.msra.mxu0 0
      %335 = vmatprep.subr.bf16.mxu0 0
      %336 = vmatpush1.bf16.msra.mxu0 0
      %337 = vmatprep.mubr.bf16.mxu0 0
      %338 = vmatmul.mubr.bf16.gmra.mrb[0].mxu0 %v303
      %v339 = vpop.f32.mrb[0].mxu0
      %v340 = vadd.f32 0.0, %v339
      %v341 = vpop.f32.mrb[0].mxu0
      %v342 = vadd.f32 0.0, %v341
      %v343 = vpop.f32.mrb[0].mxu0
      %v344 = vpop.f32.mrb[0].mxu0
      %345 = vdwg.mxu0
      %346 = vst [vmem:[%s273] sm:$0xff] %v340
      %347 = vst [vmem:[%s273 + $0x8] sm:$0xff] %v342
      %s348 = smul.u32 2, %s21
      %p349 = scmp.lt.s32.totalorder %s19, 3
      %s350 = scalar_select %p349, %s19, 3
      %p351 = scmp.lt.s32.totalorder %s20, 1
      %s352 = scalar_select %p351, %s20, 1
      %p353 = scmp.lt.s32.totalorder %s348, 1
      %s354 = scalar_select %p353, %s348, 1
      %s355 = smul.addr %s352, 2
      %s356 = sadd.s32 %s354, %s355
      %s357 = smul.addr %s350, 4
      %s358 = sadd.s32 %s356, %s357
      %s359 = smul.addr %s358, 8
      %s360 = scalar_lea.vmem %s3, %s359
      // Predicated region
      $region33: #{upsample_layer_forward.8} parent=31 // pred_check
        %p361 = pneg %p137
      $region34: #{upsample_layer_forward.8} parent=31 // pred_check_branch
        %363 = sbr.rel (%p361) target = $region36
      $region35: #{upsample_layer_forward.8} parent=31 // pred_region
        %s364 = smul.u32 2, %s21
      $region36: #{upsample_layer_forward.8} parent=31 // pred_fallthru
        _
    $region32: #{upsample_layer_forward.8} parent=5 // pred_fallthru
      _
    %p365 = scmp.le.s32.totalorder 2, %s9
    // Predicated region
    $region37: #{upsample_layer_forward.8} parent=5 // pred_check
      %p366 = pneg %p365
    $region38: #{upsample_layer_forward.8} parent=5 // pred_check_branch
      %368 = sbr.rel (%p366) target = $region40
    $region39: #{upsample_layer_forward.8} parent=5 // pred_region
      %s369 = ssub.s32 %s9, 2
      // Predicated region
      $region41: #{upsample_layer_forward.8} parent=39 // pred_check
        %p370 = pneg %p143
      $region42: #{upsample_layer_forward.8} parent=39 // pred_check_branch
        %372 = sbr.rel (%p370) target = $region44
      $region43: #{upsample_layer_forward.8} parent=39 // pred_region
        %s373 = smul.u32 2, %s24
        %p374 = scmp.lt.s32.totalorder %s22, 3
        %s375 = scalar_select %p374, %s22, 3
        %p376 = scmp.lt.s32.totalorder %s23, 1
        %s377 = scalar_select %p376, %s23, 1
        %p378 = scmp.lt.s32.totalorder %s373, 1
        %s379 = scalar_select %p378, %s373, 1
        %s380 = smul.addr %s377, 2
        %s381 = sadd.s32 %s379, %s380
        %s382 = smul.addr %s375, 4
        %s383 = sadd.s32 %s381, %s382
        %s384 = smul.addr %s383, 8
        %s385 = scalar_lea.vmem %s3, %s384
      $region44: #{upsample_layer_forward.8} parent=39 // pred_fallthru
        _
    $region40: #{upsample_layer_forward.8} parent=5 // pred_fallthru
      _
  $region6: #{upsample_layer_forward.8} parent=0 // loop_footer
    %s13 = sadd.s32 1, %s9
  $region7: #{upsample_layer_forward.8} parent=0 // loop_footer_branch
    %8 = sbr.rel target = $region3
  $region8: #{upsample_layer_forward.8} parent=0 // loop_exit
    _

// kernel: upsample_layer_forward.9
$region0: #{upsample_layer_forward.9}
  #allocation0 [shape = 'u32[]', space=smem, size = 0x4, offset = 0x4, fixed_abs, tag = 'smem constant byte address 0x4 - core index']
  #allocation1 [shape = 'u32[144,128]{1,0:T(1,128)}', space=vmem, size = 0x12000, scoped, tag = 'internal scratch']
  %s0 = inlined_call_operand.vmem [shape: f32[8,8,256], index: 0, kind: input, shape index: {}]
  %s1 = inlined_call_operand.vmem [shape: f32[8,1], index: 1, kind: input, shape index: {}]
  %s2 = inlined_call_operand.vmem [shape: f32[8,1], index: 2, kind: input, shape index: {}]
  %s3 = inlined_call_operand.vmem [shape: f32[8,8,256], index: 3, kind: output, shape index: {}]
  %s4 = sld [smem:[#allocation0]]
  $region45: #{upsample_layer_forward.9} parent=0
    _
  %s6 = ssub.s32 1, %s4
  %s7 = scalar_select 0, %s6, %s4
  loop: start=0, step=1, limit=10
  $region2: #{upsample_layer_forward.9} parent=0 // loop_pre_header
    _
  $region3: #{upsample_layer_forward.9} parent=0 // loop_header
    %s9 = sphi 0, %s13
    %p10 = scmp.ge.s32.totalorder %s9, 10
    %s16 = sphi 0, %s28
    %s17 = sphi 0, %s24
    %s18 = sphi 0, %s16
    %s19 = sphi 0, %s17
    %s20 = sphi 0, %s18
    %s21 = sphi 0, %s19
    %s33 = sphi 0, %s35
    %s36 = sphi 0, %s33
    %s37 = sphi 0, %s36
    %s53 = sphi 0, %s37
    %s57 = sphi 0, %s57
    %s59 = sphi 0, %s57
    %s60 = sphi 0, %s59
    %s74 = sphi 0, %s60
    %s78 = sphi 0, %s78
    %s80 = sphi 0, %s78
    %s81 = sphi 0, %s80
    %s95 = sphi 0, %s81
    %s103 = sphi 0, %s105
    %s106 = sphi 0, %s103
    %s107 = sphi 0, %s106
    %s123 = sphi 0, %s107
  $region4: #{upsample_layer_forward.9} parent=0 // loop_header_branch
    %12 = sbr.rel (%p10) target = $region8
  $region5: #{upsample_layer_forward.9} parent=0 // loop_body
    %s14 = ssub.s32 %s9, 1
    %s15 = ssub.s32 %s9, 2
    %s22 = sadd.s32 1, %s17
    %p23 = scmp.ge.s32.totalorder %s22, 1
    %s24 = scalar_select %p23, 0, %s22
    %s25 = sadd.s32 1, %s16
    %s26 = scalar_select %p23, %s25, %s16
    %p27 = scmp.ge.s32.totalorder %s26, 8
    %s28 = scalar_select %p27, 0, %s26
    %s29 = ssub.s32 %s16, %s28
    %s30 = ssub.s32 %s17, %s24
    %s31 = sor.u32 %s29, %s30
    %p32 = scmp.eq.s32.totalorder %s31, 0
    %s34 = sadd.s32 %s33, 1
    %s35 = scalar_select %p32, %s33, %s34
    %p38 = pneg %p32
    %p39 = scmp.eq.s32.totalorder %s9, 7
    %p40 = por %p38, %p39
    %p41 = scmp.ne.s32.totalorder %s33, %s36
    %p42 = scmp.eq.s32.totalorder %s9, 0
    %p43 = por %p41, %p42
    %p44 = scmp.ne.s32.totalorder %s33, %s36
    %p45 = scmp.eq.s32.totalorder %s14, 7
    %p46 = por %p44, %p45
    %p47 = scmp.ne.s32.totalorder %s36, %s37
    %p48 = scmp.eq.s32.totalorder %s14, 0
    %p49 = por %p47, %p48
    %p50 = scmp.ne.s32.totalorder %s36, %s37
    %p51 = scmp.eq.s32.totalorder %s15, 7
    %p52 = por %p50, %p51
    %p54 = scmp.ne.s32.totalorder %s37, %s53
    %p55 = scmp.eq.s32.totalorder %s15, 0
    %p56 = por %p54, %p55
    %s58 = sadd.s32 %s57, 1
    %p61 = scmp.eq.s32.totalorder %s9, 7
    %p62 = scmp.ne.s32.totalorder %s57, %s59
    %p63 = scmp.eq.s32.totalorder %s9, 0
    %p64 = por %p62, %p63
    %p65 = scmp.ne.s32.totalorder %s57, %s59
    %p66 = scmp.eq.s32.totalorder %s14, 7
    %p67 = por %p65, %p66
    %p68 = scmp.ne.s32.totalorder %s59, %s60
    %p69 = scmp.eq.s32.totalorder %s14, 0
    %p70 = por %p68, %p69
    %p71 = scmp.ne.s32.totalorder %s59, %s60
    %p72 = scmp.eq.s32.totalorder %s15, 7
    %p73 = por %p71, %p72
    %p75 = scmp.ne.s32.totalorder %s60, %s74
    %p76 = scmp.eq.s32.totalorder %s15, 0
    %p77 = por %p75, %p76
    %s79 = sadd.s32 %s78, 1
    %p82 = scmp.eq.s32.totalorder %s9, 7
    %p83 = scmp.ne.s32.totalorder %s78, %s80
    %p84 = scmp.eq.s32.totalorder %s9, 0
    %p85 = por %p83, %p84
    %p86 = scmp.ne.s32.totalorder %s78, %s80
    %p87 = scmp.eq.s32.totalorder %s14, 7
    %p88 = por %p86, %p87
    %p89 = scmp.ne.s32.totalorder %s80, %s81
    %p90 = scmp.eq.s32.totalorder %s14, 0
    %p91 = por %p89, %p90
    %p92 = scmp.ne.s32.totalorder %s80, %s81
    %p93 = scmp.eq.s32.totalorder %s15, 7
    %p94 = por %p92, %p93
    %p96 = scmp.ne.s32.totalorder %s81, %s95
    %p97 = scmp.eq.s32.totalorder %s15, 0
    %p98 = por %p96, %p97
    %s99 = ssub.s32 %s16, %s28
    %s100 = ssub.s32 %s17, %s24
    %s101 = sor.u32 %s99, %s100
    %p102 = scmp.eq.s32.totalorder %s101, 0
    %s104 = sadd.s32 %s103, 1
    %s105 = scalar_select %p102, %s103, %s104
    %p108 = pneg %p102
    %p109 = scmp.eq.s32.totalorder %s9, 7
    %p110 = por %p108, %p109
    %p111 = scmp.ne.s32.totalorder %s103, %s106
    %p112 = scmp.eq.s32.totalorder %s9, 0
    %p113 = por %p111, %p112
    %p114 = scmp.ne.s32.totalorder %s103, %s106
    %p115 = scmp.eq.s32.totalorder %s14, 7
    %p116 = por %p114, %p115
    %p117 = scmp.ne.s32.totalorder %s106, %s107
    %p118 = scmp.eq.s32.totalorder %s14, 0
    %p119 = por %p117, %p118
    %p120 = scmp.ne.s32.totalorder %s106, %s107
    %p121 = scmp.eq.s32.totalorder %s15, 7
    %p122 = por %p120, %p121
    %p124 = scmp.ne.s32.totalorder %s107, %s123
    %p125 = scmp.eq.s32.totalorder %s15, 0
    %p126 = por %p124, %p125
    %p127 = scmp.le.s32.totalorder 1, %s9
    %p128 = scmp.lt.s32.totalorder %s9, 9
    %p129 = pnand %p127, %p128
    %p130 = pneg %p129
    // Predicated region
    $region9: #{upsample_layer_forward.9} parent=5 // pred_check
      _
    $region10: #{upsample_layer_forward.9} parent=5 // pred_check_branch
      %132 = sbr.rel (%p129) target = $region12
    $region11: #{upsample_layer_forward.9} parent=5 // pred_region
      %s133 = ssub.s32 %s9, 1
      // Predicated region
      $region13: #{upsample_layer_forward.9} parent=11 // pred_check
        %p134 = pneg %p70
      $region14: #{upsample_layer_forward.9} parent=11 // pred_check_branch
        %136 = sbr.rel (%p134) target = $region16
      $region15: #{upsample_layer_forward.9} parent=11 // pred_region
        _
      $region16: #{upsample_layer_forward.9} parent=11 // pred_fallthru
        _
      // Predicated region
      $region17: #{upsample_layer_forward.9} parent=11 // pred_check
        %p137 = pneg %p91
      $region18: #{upsample_layer_forward.9} parent=11 // pred_check_branch
        %139 = sbr.rel (%p137) target = $region20
      $region19: #{upsample_layer_forward.9} parent=11 // pred_region
        _
      $region20: #{upsample_layer_forward.9} parent=11 // pred_fallthru
        _
    $region12: #{upsample_layer_forward.9} parent=5 // pred_fallthru
      _
    %p140 = scmp.lt.s32.totalorder %s9, 8
    // Predicated region
    $region21: #{upsample_layer_forward.9} parent=5 // pred_check
      %p141 = pneg %p140
    $region22: #{upsample_layer_forward.9} parent=5 // pred_check_branch
      %143 = sbr.rel (%p141) target = $region24
    $region23: #{upsample_layer_forward.9} parent=5 // pred_region
      // Predicated region
      $region25: #{upsample_layer_forward.9} parent=23 // pred_check
        %p144 = pneg %p43
      $region26: #{upsample_layer_forward.9} parent=23 // pred_check_branch
        %146 = sbr.rel (%p144) target = $region28
      $region27: #{upsample_layer_forward.9} parent=23 // pred_region
        %s147 = smul.u32 2, %s17
        %p148 = scmp.lt.s32.totalorder %s16, 7
        %s149 = scalar_select %p148, %s16, 7
        %p150 = scmp.lt.s32.totalorder %s147, 1
        %s151 = scalar_select %p150, %s147, 1
        %s152 = smul.addr %s149, 2
        %s153 = sadd.s32 %s151, %s152
        %s154 = smul.addr %s153, 8
        %s155 = scalar_lea.vmem %s0, %s154
        %s156 = smul.u32 2, %s17
      $region28: #{upsample_layer_forward.9} parent=23 // pred_fallthru
        _
    $region24: #{upsample_layer_forward.9} parent=5 // pred_fallthru
      _
    %p157 = scmp.le.s32.totalorder 1, %s9
    %p158 = scmp.lt.s32.totalorder %s9, 9
    %p159 = pnand %p157, %p158
    %p160 = pneg %p159
    // Predicated region
    $region29: #{upsample_layer_forward.9} parent=5 // pred_check
      _
    $region30: #{upsample_layer_forward.9} parent=5 // pred_check_branch
      %162 = sbr.rel (%p159) target = $region32
    $region31: #{upsample_layer_forward.9} parent=5 // pred_region
      %s163 = ssub.s32 %s9, 1
      %s164 = smul.u32 2, %s19
      %p165 = scmp.lt.s32.totalorder %s18, 7
      %s166 = scalar_select %p165, %s18, 7
      %p167 = scmp.lt.s32.totalorder %s164, 1
      %s168 = scalar_select %p167, %s164, 1
      %s169 = smul.addr %s166, 2
      %s170 = sadd.s32 %s168, %s169
      %s171 = smul.addr %s170, 8
      %s172 = scalar_lea.vmem %s0, %s171
      %p173 = pneg %p49
      %p174 = pneg %p46
      %p175 = pneg %p70
      %p176 = pneg %p67
      %p177 = pneg %p91
      %p178 = pneg %p88
      %p179 = pneg %p119
      %p180 = pneg %p116
      %s181 = smul.u32 2, %s19
      %p182 = scmp.lt.s32.totalorder %s18, 7
      %s183 = scalar_select %p182, %s18, 7
      %p184 = scmp.lt.s32.totalorder %s181, 1
      %s185 = scalar_select %p184, %s181, 1
      %s186 = smul.addr %s183, 2
      %s187 = sadd.s32 %s185, %s186
      %s188 = smul.addr %s187, 8
      %s189 = scalar_lea.vmem %s3, %s188
      %s190 = smul.u32 2, %s19
      %p191 = scmp.lt.s32.totalorder %s18, 7
      %s192 = scalar_select %p191, %s18, 7
      %p193 = scmp.lt.s32.totalorder %s190, 1
      %s194 = scalar_select %p193, %s190, 1
      %s195 = smul.addr %s192, 2
      %s196 = sadd.s32 %s194, %s195
      %s197 = smul.addr %s196, 8
      %s198 = scalar_lea.vmem %s0, %s197
      %s199 = smul.u32 2, %s19
      %s200 = smul.u32 2, %s19
      %p201 = scmp.lt.s32.totalorder %s18, 7
      %s202 = scalar_select %p201, %s18, 7
      %p203 = scmp.lt.s32.totalorder %s200, 1
      %s204 = scalar_select %p203, %s200, 1
      %s205 = smul.addr %s202, 2
      %s206 = sadd.s32 %s204, %s205
      %s207 = smul.addr %s206, 8
      %s208 = scalar_lea.vmem %s3, %s207
      %s209 = smul.u32 2, %s19
      %v210 = vld [vmem:[%s198] sm:$0xff]
      %v211 = vld [vmem:[%s198 + $0x8] sm:$0xff]
      %v212 = vld [vmem:[%s1] sm:$0xff]
      %214 = vset.pattern.permute.xlu0 0
      %215 = vperm.xlu0 %214, %v212
      %v216 = vpop.permute.xlu0 %215
      %v218 = vmul.f32 %v210, %v216
      %v219 = vmul.f32 %v211, %v216
      %v220 = vld [vmem:[%s2] sm:$0xff]
      %222 = vset.pattern.permute.xlu0 0
      %223 = vperm.xlu0 %222, %v220
      %v224 = vpop.permute.xlu0 %223
      %v226 = vadd.f32 %v218, %v224
      %v227 = vadd.f32 %v219, %v224
      %v228 = vmax.f32 %v226, 0.0
      %v229 = vmax.f32 %v227, 0.0
      %230 = vst [vmem:[%s208] sm:$0xff] %v228
      %231 = vst [vmem:[%s208 + $0x8] sm:$0xff] %v229
      %s232 = smul.u32 2, %s19
      %p233 = scmp.lt.s32.totalorder %s18, 7
      %s234 = scalar_select %p233, %s18, 7
      %p235 = scmp.lt.s32.totalorder %s232, 1
      %s236 = scalar_select %p235, %s232, 1
      %s237 = smul.addr %s234, 2
      %s238 = sadd.s32 %s236, %s237
      %s239 = smul.addr %s238, 8
      %s240 = scalar_lea.vmem %s3, %s239
      // Predicated region
      $region33: #{upsample_layer_forward.9} parent=31 // pred_check
        %p241 = pneg %p116
      $region34: #{upsample_layer_forward.9} parent=31 // pred_check_branch
        %243 = sbr.rel (%p241) target = $region36
      $region35: #{upsample_layer_forward.9} parent=31 // pred_region
        %s244 = smul.u32 2, %s19
      $region36: #{upsample_layer_forward.9} parent=31 // pred_fallthru
        _
    $region32: #{upsample_layer_forward.9} parent=5 // pred_fallthru
      _
    %p245 = scmp.le.s32.totalorder 2, %s9
    // Predicated region
    $region37: #{upsample_layer_forward.9} parent=5 // pred_check
      %p246 = pneg %p245
    $region38: #{upsample_layer_forward.9} parent=5 // pred_check_branch
      %248 = sbr.rel (%p246) target = $region40
    $region39: #{upsample_layer_forward.9} parent=5 // pred_region
      %s249 = ssub.s32 %s9, 2
      // Predicated region
      $region41: #{upsample_layer_forward.9} parent=39 // pred_check
        %p250 = pneg %p122
      $region42: #{upsample_layer_forward.9} parent=39 // pred_check_branch
        %252 = sbr.rel (%p250) target = $region44
      $region43: #{upsample_layer_forward.9} parent=39 // pred_region
        %s253 = smul.u32 2, %s21
        %p254 = scmp.lt.s32.totalorder %s20, 7
        %s255 = scalar_select %p254, %s20, 7
        %p256 = scmp.lt.s32.totalorder %s253, 1
        %s257 = scalar_select %p256, %s253, 1
        %s258 = smul.addr %s255, 2
        %s259 = sadd.s32 %s257, %s258
        %s260 = smul.addr %s259, 8
        %s261 = scalar_lea.vmem %s3, %s260
      $region44: #{upsample_layer_forward.9} parent=39 // pred_fallthru
        _
    $region40: #{upsample_layer_forward.9} parent=5 // pred_fallthru
      _
  $region6: #{upsample_layer_forward.9} parent=0 // loop_footer
    %s13 = sadd.s32 1, %s9
  $region7: #{upsample_layer_forward.9} parent=0 // loop_footer_branch
    %8 = sbr.rel target = $region3
  $region8: #{upsample_layer_forward.9} parent=0 // loop_exit
    _

</llo_original>
